<compile_context>
chip_gen: v7x
topology: tpu7x:2x2x1
jax: 0.10.0
libtpu: 0.0.40
codegen_flags: <defaults>
</compile_context>

<pallas_src>
import math
import functools

import jax
import jax.numpy as jnp
from jax import lax
from jax.experimental import pallas as pl
from jax.experimental.pallas import tpu as pltpu


def _round_up(x, m):
    return (x + m - 1) // m * m


# ---------------------------------------------------------------------------
# Pallas kernel: one (batch-tile, class-tile) block per grid step.
#   scaled = clip((feats @ w) * rsqrt(sum(w^2, axis=0)) * s, (-1+eps)s, (1-eps)s)
#   out    = where(col == label, precomputed_margin_logit, scaled)
# ---------------------------------------------------------------------------
def _otm_kernel(label_ref, fix_ref, feats_ref, w_ref, out_ref, *, eps, s, tn):
    j = pl.program_id(1)                       # class-tile index

    w = w_ref[...]                             # (E, tn) bf16 (or f32)

    # Column sum-of-squares on the MXU (M dim is tiny -> MXU is otherwise
    # idle): ones(8,E) @ (w*w) -> (8, tn), keep row 0.  Avoids an (E, tn)
    # f32 cast + cross-sublane reduction on the VPU/XLU.
    ones_row = jnp.ones((8, w.shape[0]), dtype=w.dtype)
    sumsq = jnp.dot(ones_row, w * w, preferred_element_type=jnp.float32)[0:1, :]
    inv_scale = lax.rsqrt(sumsq) * s           # (1, tn); s folded in

    dot = jnp.dot(feats_ref[...], w, preferred_element_type=jnp.float32)  # (tb, tn)
    scaled = jnp.clip(dot * inv_scale, (-1.0 + eps) * s, (1.0 - eps) * s)

    # Label-column margin value was precomputed per row in the wrapper
    # (B arccos/cos instead of B*C) — select it in with one compare + where.
    col = lax.broadcasted_iota(jnp.int32, (1, tn), 1)       # (1, tn)
    is_label = col == (label_ref[...] - j * tn)             # (tb, tn)
    out_ref[...] = jnp.where(is_label, fix_ref[...], scaled).astype(out_ref.dtype)


# ---------------------------------------------------------------------------
# Tiling / VMEM budgeting helpers.
# ---------------------------------------------------------------------------
def _vmem_budget_bytes():
    """~75% of physical per-core VMEM: ~48 MiB v7x, ~96 MiB v5e/v6e."""
    try:
        cap = pltpu.get_tpu_info().vmem_capacity_bytes
    except Exception:
        cap = 64 << 20                          # conservative fallback (v7x-sized)
    return int(cap) * 3 // 4


def _vmem_need(tb, tn, E, itemsize_w, itemsize_f, out_itemsize):
    w_stream = 2 * E * tn * itemsize_w          # double-buffered weight tile
    feats_res = 2 * tb * E * itemsize_f         # feature tile (2 buffers)
    out_stream = 2 * tb * tn * out_itemsize     # double-buffered output tile
    scalars = 4 * tb * 4                        # label + fixup blocks
    temps = (E * tn * itemsize_w                # w*w temporary
             + 4 * tb * tn * 4                  # dot / scaled / mask / where temps
             + 8 * E * itemsize_w + 8 * tn * 4  # ones row + (8, tn) sumsq
             + (1 << 20))                       # misc slack
    return w_stream + feats_res + out_stream + scalars + temps


def _choose_batch_tile(B):
    if B <= 1024:
        return B
    for tb in (512, 256, 128):
        if B % tb == 0:
            return tb
    return B


def _choose_class_tile(tb, E, C, itemsize_w, itemsize_f, out_itemsize, budget):
    max_tn = _round_up(max(C, 1), 128)
    for tn in (2048, 1024, 512, 256, 128):
        if tn > max_tn:
            continue
        if _vmem_need(tb, tn, E, itemsize_w, itemsize_f, out_itemsize) <= budget:
            return tn
    return min(128, max_tn)


# ---------------------------------------------------------------------------
# Forward wrapper (mirrors OTMFace.forward; buffer updates returned
# functionally instead of mutated in place).
# ---------------------------------------------------------------------------
def otm_face_forward(feats, norms, label, z_pose, kernel, batch_mean, batch_std,
                     *, m=0.4, h=0.333, s=64.0, t_alpha=0.01, eps=1e-3,
                     include_pose=False, include_quality=False,
                     out_dtype=jnp.float32):
    """Returns (scaled_cosine_m, new_batch_mean, new_batch_std)."""
    B, E = feats.shape
    E2, C = kernel.shape
    assert E == E2

    # ---- batch-norm statistics + EMA buffer update (torch.no_grad block) ----
    safe_norms = jnp.clip(norms, 0.001, 100.0)                  # (B, 1)
    mean = jnp.mean(safe_norms)
    std = jnp.std(safe_norms, ddof=1)                           # torch default: unbiased
    new_batch_mean = mean * t_alpha + (1.0 - t_alpha) * batch_mean
    new_batch_std = std * t_alpha + (1.0 - t_alpha) * batch_std

    msq = (safe_norms - new_batch_mean) / (new_batch_std + eps)
    msq = jnp.clip(msq * h, -1.0, 1.0)                          # quality scaler (B,1)
    msp = z_pose.reshape(-1, 1).astype(jnp.float32)             # pose scaler   (B,1)

    if include_quality and include_pose:
        margin_scaler = jnp.minimum(msq, msp)
    elif include_pose:
        margin_scaler = msp
    elif include_quality:
        margin_scaler = msq
    else:
        margin_scaler = jnp.ones_like(msp)

    g_angular = (m * margin_scaler).astype(jnp.float32)         # (B,1)
    g_add = (m + m * margin_scaler).astype(jnp.float32)         # (B,1)

    # ---- label-column margin fixup: B transcendentals in plain JAX ---------
    lab = label.reshape(-1).astype(jnp.int32)
    w_lab = jnp.take(kernel, lab, axis=1).astype(jnp.float32)   # (E, B) gather
    w_lab = w_lab / jnp.linalg.norm(w_lab, axis=0, keepdims=True)
    cos_lab = jnp.sum(feats.astype(jnp.float32) * w_lab.T, axis=1, keepdims=True)
    cos_lab = jnp.clip(cos_lab, -1.0 + eps, 1.0 - eps)          # (B,1)
    theta_m = jnp.clip(jnp.arccos(cos_lab) + g_angular, eps, math.pi - eps)
    fix_val = ((jnp.cos(theta_m) - g_add) * s).astype(jnp.float32)  # (B,1)
    label2 = lab.reshape(-1, 1)                                 # (B,1) int32

    # ---- tiling & VMEM budgeting -------------------------------------------
    itemsize_w = jnp.dtype(kernel.dtype).itemsize
    itemsize_f = jnp.dtype(feats.dtype).itemsize
    out_itemsize = jnp.dtype(out_dtype).itemsize

    budget = _vmem_budget_bytes()
    tb = _choose_batch_tile(B)
    tn = _choose_class_tile(tb, E, C, itemsize_w, itemsize_f, out_itemsize, budget)

    need = _vmem_need(tb, tn, E, itemsize_w, itemsize_f, out_itemsize)
    vmem_limit = int(min(max(need + (8 << 20), 32 << 20), budget))

    # ---- pad C to a multiple of the class tile with unit-norm dummy columns
    # (keeps lane-dense output blocks; avoids rsqrt(0) on padded columns).
    C_pad = _round_up(C, tn)
    if C_pad != C:
        pad_cols = C_pad - C
        pad_block = jnp.zeros((E, pad_cols), dtype=kernel.dtype)
        pad_block = pad_block.at[0, :].set(jnp.ones((pad_cols,), dtype=kernel.dtype))
        kernel_p = jnp.concatenate([kernel, pad_block], axis=1)
    else:
        kernel_p = kernel

    nb = B // tb if B % tb == 0 else 1
    if B % tb != 0:
        tb = B
    nc = C_pad // tn

    out_p = pl.pallas_call(
        functools.partial(_otm_kernel, eps=eps, s=s, tn=tn),
        out_shape=jax.ShapeDtypeStruct((B, C_pad), out_dtype),
        grid_spec=pltpu.PrefetchScalarGridSpec(
            num_scalar_prefetch=0,
            grid=(nb, nc),
            in_specs=[
                pl.BlockSpec((tb, 1), lambda i, j: (i, 0)),    # label
                pl.BlockSpec((tb, 1), lambda i, j: (i, 0)),    # precomputed fixup
                pl.BlockSpec((tb, E), lambda i, j: (i, 0)),    # feats tile
                pl.BlockSpec((E, tn), lambda i, j: (0, j)),    # streamed weight tile
            ],
            out_specs=pl.BlockSpec((tb, tn), lambda i, j: (i, j)),
        ),
        compiler_params=pltpu.CompilerParams(
            dimension_semantics=("parallel", "parallel"),      # megacore-friendly
            vmem_limit_bytes=vmem_limit,
        ),
    )(label2, fix_val, feats, kernel_p)

    out = out_p[:, :C] if C_pad != C else out_p
    return out, new_batch_mean, new_batch_std


# ---------------------------------------------------------------------------
# Pure-JAX reference (mirrors the PyTorch forward) for verification.
# ---------------------------------------------------------------------------
def _reference(feats, norms, label, z_pose, kernel, batch_mean, batch_std,
               *, m=0.4, h=0.333, s=64.0, t_alpha=0.01, eps=1e-3,
               include_pose=False, include_quality=False):
    C = kernel.shape[1]
    kn = kernel / jnp.linalg.norm(kernel, axis=0, keepdims=True)
    cosine = jnp.clip(feats @ kn, -1.0 + eps, 1.0 - eps)
    safe_norms = jnp.clip(norms, 0.001, 100.0)
    mean = jnp.mean(safe_norms)
    std = jnp.std(safe_norms, ddof=1)
    bm = mean * t_alpha + (1 - t_alpha) * batch_mean
    bs = std * t_alpha + (1 - t_alpha) * batch_std
    msq = jnp.clip(((safe_norms - bm) / (bs + eps)) * h, -1, 1)
    msp = z_pose.reshape(-1, 1)
    if include_quality and include_pose:
        ms = jnp.minimum(msq, msp)
    elif include_pose:
        ms = msp
    elif include_quality:
        ms = msq
    else:
        ms = jnp.ones_like(msp)
    onehot = jax.nn.one_hot(label, C, dtype=jnp.float32)
    m_arc = onehot * (m * ms)
    theta = jnp.arccos(cosine)
    theta_m = jnp.clip(theta + m_arc, eps, math.pi - eps)
    cosine2 = jnp.cos(theta_m)
    m_cos = onehot * (m + m * ms)
    return (cosine2 - m_cos) * s


if __name__ == "__main__":
    # Small synthetic shapes consistent with the module's forward; C chosen
    # non-divisible by the class tile to exercise the padding path.
    B, E, C = 8, 128, 3000      # batch, embedding_size, classnum

    key = jax.random.PRNGKey(0)
    k_feat, k_norm, k_lab, k_pose, k_w = jax.random.split(key, 5)

    feats_f32 = jax.random.normal(k_feat, (B, E), dtype=jnp.float32)
    feats_f32 = feats_f32 / jnp.linalg.norm(feats_f32, axis=1, keepdims=True)
    feats = feats_f32.astype(jnp.bfloat16)          # stored bf16 upstream

    norms = jax.random.uniform(k_norm, (B, 1), minval=5.0, maxval=40.0,
                               dtype=jnp.float32)
    label = jax.random.randint(k_lab, (B,), 0, C, dtype=jnp.int32)
    z_pose = jax.random.uniform(k_pose, (B,), minval=0.0, maxval=1.0,
                                dtype=jnp.float32)

    # Deterministic parameter init: uniform(-1,1) then per-column renorm
    # (matches kernel.data.uniform_(-1,1).renorm_(2,1,1e-5).mul_(1e5) up to RNG),
    # stored bf16 so the MXU streams half the HBM bytes.
    kernel_f32 = jax.random.uniform(k_w, (E, C), minval=-1.0, maxval=1.0,
                                    dtype=jnp.float32)
    kernel_f32 = kernel_f32 / jnp.linalg.norm(kernel_f32, axis=0, keepdims=True)
    kernel = kernel_f32.astype(jnp.bfloat16)

    batch_mean = jnp.ones((1,), jnp.float32) * 20.0
    batch_std = jnp.ones((1,), jnp.float32) * 100.0

    out, new_bm, new_bs = otm_face_forward(
        feats, norms, label, z_pose, kernel, batch_mean, batch_std)
    jax.block_until_ready(out)

    # Reference computed on the same bf16-rounded operands (cast back to f32);
    # remaining differences are accumulation order + bf16-squared norms only.
    ref = _reference(feats.astype(jnp.float32), norms, label, z_pose,
                     kernel.astype(jnp.float32), batch_mean, batch_std)
    assert out.shape == (B, C)
    max_err = float(jnp.max(jnp.abs(out - ref)))
    assert max_err < 2e-2, max_err

    print("KERNEL_OK")
</pallas_src>

<mosaic_0001>
module attributes {stable_mosaic.version = 11 : i64} {
  func.func @_otm_kernel(%arg0: i32, %arg1: i32, %arg2: memref<8x1xi32, #tpu.memory_space<vmem>>, %arg3: memref<8x1xf32, #tpu.memory_space<vmem>>, %arg4: memref<8x128xbf16, #tpu.memory_space<vmem>>, %arg5: memref<128x2048xbf16, #tpu.memory_space<vmem>>, %arg6: memref<8x2048xf32, #tpu.memory_space<vmem>>) attributes {dimension_semantics = [#tpu.dimension_semantics<parallel>, #tpu.dimension_semantics<parallel>], iteration_bounds = array<i64: 1, 2>, scalar_prefetch = 0 : i64, scratch_operands = 0 : i64, tpu.core_type = #tpu.core_type<tc>, window_params = [{transform_indices = @transform_0, window_bounds = array<i64: 8, 1>}, {transform_indices = @transform_1, window_bounds = array<i64: 8, 1>}, {transform_indices = @transform_2, window_bounds = array<i64: 8, 128>}, {transform_indices = @transform_3, window_bounds = array<i64: 128, 2048>}, {transform_indices = @transform_4, window_bounds = array<i64: 8, 2048>}]} {
    %c0 = arith.constant 0 : index
    %c0_0 = arith.constant 0 : index
    %0 = vector.load %arg5[%c0, %c0_0] : memref<128x2048xbf16, #tpu.memory_space<vmem>>, vector<128x2048xbf16>
    %cst = arith.constant 1.000000e+00 : bf16
    %1 = vector.broadcast %cst : bf16 to vector<8x128xbf16>
    %2 = arith.mulf %0, %0 : vector<128x2048xbf16>
    %cst_1 = arith.constant dense<0.000000e+00> : vector<8x2048xf32>
    %3 = tpu.matmul %1, %2, %cst_1 {dimension_numbers = #tpu.dot_dimension_numbers<[1], [0], [0], [1], [0, 0, 1, 1], [], []>} : vector<8x128xbf16>, vector<128x2048xbf16>, vector<8x2048xf32> -> vector<8x2048xf32>
    %4 = vector.extract_strided_slice %3 {offsets = [0, 0], sizes = [1, 2048], strides = [1, 1]} : vector<8x2048xf32> to vector<1x2048xf32>
    %5 = math.rsqrt %4 : vector<1x2048xf32>
    %cst_2 = arith.constant 6.400000e+01 : f32
    %6 = vector.broadcast %cst_2 : f32 to vector<1x2048xf32>
    %7 = arith.mulf %5, %6 : vector<1x2048xf32>
    %c0_3 = arith.constant 0 : index
    %c0_4 = arith.constant 0 : index
    %8 = vector.load %arg4[%c0_3, %c0_4] : memref<8x128xbf16, #tpu.memory_space<vmem>>, vector<8x128xbf16>
    %cst_5 = arith.constant dense<0.000000e+00> : vector<8x2048xf32>
    %9 = tpu.matmul %8, %0, %cst_5 {dimension_numbers = #tpu.dot_dimension_numbers<[1], [0], [0], [1], [0, 0, 1, 1], [], []>} : vector<8x128xbf16>, vector<128x2048xbf16>, vector<8x2048xf32> -> vector<8x2048xf32>
    %10 = vector.broadcast %7 : vector<1x2048xf32> to vector<8x2048xf32>
    %11 = arith.mulf %9, %10 : vector<8x2048xf32>
    %cst_6 = arith.constant -6.393600e+01 : f32
    %cst_7 = arith.constant 6.393600e+01 : f32
    %12 = vector.broadcast %cst_6 : f32 to vector<8x2048xf32>
    %13 = arith.maximumf %12, %11 : vector<8x2048xf32>
    %14 = vector.broadcast %cst_7 : f32 to vector<8x2048xf32>
    %15 = arith.minimumf %14, %13 : vector<8x2048xf32>
    %16 = tpu.iota {dimensions = array<i32: 1>} : vector<1x2048xi32>
    %c0_8 = arith.constant 0 : index
    %c0_9 = arith.constant 0 : index
    %17 = vector.load %arg2[%c0_8, %c0_9] : memref<8x1xi32, #tpu.memory_space<vmem>>, vector<8x1xi32>
    %c2048_i32 = arith.constant 2048 : i32
    %18 = arith.muli %arg1, %c2048_i32 : i32
    %19 = vector.broadcast %18 : i32 to vector<8x1xi32>
    %20 = arith.subi %17, %19 : vector<8x1xi32>
    %21 = vector.broadcast %16 : vector<1x2048xi32> to vector<8x2048xi32>
    %22 = vector.broadcast %20 : vector<8x1xi32> to vector<8x2048xi32>
    %23 = arith.cmpi eq, %21, %22 : vector<8x2048xi32>
    %c0_10 = arith.constant 0 : index
    %c0_11 = arith.constant 0 : index
    %24 = vector.load %arg3[%c0_10, %c0_11] : memref<8x1xf32, #tpu.memory_space<vmem>>, vector<8x1xf32>
    %25 = vector.shape_cast %24 : vector<8x1xf32> to vector<8x1xf32>
    %26 = vector.broadcast %25 : vector<8x1xf32> to vector<8x2048xf32>
    %27 = arith.select %23, %26, %15 : vector<8x2048xi1>, vector<8x2048xf32>
    %c0_12 = arith.constant 0 : index
    %c0_13 = arith.constant 0 : index
    %28 = vector.load %arg6[%c0_12, %c0_13] : memref<8x2048xf32, #tpu.memory_space<vmem>>, vector<8x2048xf32>
    tpu.vector_store %arg6[%c0_12, %c0_13], %27 {strides = array<i32>} : memref<8x2048xf32, #tpu.memory_space<vmem>>, vector<8x2048xf32>,
    return
  }
  func.func @transform_0(%arg0: i32, %arg1: i32) -> (i32, i32) {
    %c0_i32 = arith.constant 0 : i32
    %c0_i32_0 = arith.constant 0 : i32
    return %arg0, %c0_i32 : i32, i32
  }
  func.func @transform_1(%arg0: i32, %arg1: i32) -> (i32, i32) {
    %c0_i32 = arith.constant 0 : i32
    %c0_i32_0 = arith.constant 0 : i32
    return %arg0, %c0_i32 : i32, i32
  }
  func.func @transform_2(%arg0: i32, %arg1: i32) -> (i32, i32) {
    %c0_i32 = arith.constant 0 : i32
    %c0_i32_0 = arith.constant 0 : i32
    return %arg0, %c0_i32 : i32, i32
  }
  func.func @transform_3(%arg0: i32, %arg1: i32) -> (i32, i32) {
    %c0_i32 = arith.constant 0 : i32
    %c0_i32_0 = arith.constant 0 : i32
    return %c0_i32, %arg1 : i32, i32
  }
  func.func @transform_4(%arg0: i32, %arg1: i32) -> (i32, i32) {
    %c0_i32 = arith.constant 0 : i32
    return %arg0, %arg1 : i32, i32
  }
}

</mosaic_0001>

<llo_original>
// kernel: tpu_custom_call.1
$region0: #{tpu_custom_call.1}
  #allocation0 [shape = 'u32[]', space=smem, size = 0x4, offset = 0x4, fixed_abs, tag = 'smem constant byte address 0x4 - core index']
  #allocation1 [shape = 'u32[144,128]{1,0:T(1,128)}', space=vmem, size = 0x12000, scoped, tag = 'internal scratch']
  %s0 = inlined_call_operand.vmem [shape: s32[8,1], index: 0, kind: input, shape index: {}]
  %s1 = inlined_call_operand.vmem [shape: f32[8,1], index: 1, kind: input, shape index: {}]
  %s2 = inlined_call_operand.vmem [shape: bf16[8,128], index: 2, kind: input, shape index: {}]
  %s3 = inlined_call_operand.hbm [shape: bf16[128,4096], index: 3, kind: input, shape index: {}]
  %s4 = inlined_call_operand.hbm [shape: f32[8,4096], index: 4, kind: output, shape index: {}]
  %s5 = sld [smem:[#allocation0]]
  $region53: #{tpu_custom_call.1} parent=0
    _
  %s7 = ssub.s32 1, %s5
  %s8 = scalar_select 0, %s7, %s5
  $region1: #{tpu_custom_call.1} parent=0
    #allocation2 [shape = 'u8[1048576]{0}', space=vmem, size = 0x100000, scoped, tag = 'input window, operand 3']
    #allocation3 [shape = 's32[2]{0}', space=sflag, size = 0x8, scoped, tag = 'scoped memory for tpu_custom_call.1']
    #allocation4 [shape = 's32[2]{0}', space=sflag, size = 0x8, scoped, tag = 'scoped memory for tpu_custom_call.1']
    #allocation5 [shape = 'u8[131072]{0}', space=vmem, size = 0x20000, scoped, tag = 'output window, operand 0']
    %9 = vsyncpa [#allocation3], 0
    %s10 = scalar_lea.sflag [#allocation3], 1
    %11 = vsyncpa %s10, 0
    %12 = vsyncpa [#allocation4], 0
    %s13 = scalar_lea.sflag [#allocation4], 1
    %14 = vsyncpa %s13, 0
    loop: start=0, step=1, limit=4
    $region2: #{tpu_custom_call.1} parent=1 // loop_pre_header
      _
    $region3: #{tpu_custom_call.1} parent=1 // loop_header
      %s16 = sphi 0, %s20
      %p17 = scmp.ge.s32.totalorder %s16, 4
      %s23 = sphi 0, %s35
      %s24 = sphi 0, %s31
      %s25 = sphi 0, %s23
      %s26 = sphi 0, %s24
      %s27 = sphi 0, %s25
      %s28 = sphi 0, %s26
      %s38 = sphi 0, %s40
      %s41 = sphi 0, %s38
      %s42 = sphi 0, %s41
      %s58 = sphi 0, %s42
      %s64 = sphi 0, %s66
      %s67 = sphi 0, %s64
      %s68 = sphi 0, %s67
      %s84 = sphi 0, %s68
      %s90 = sphi 0, %s92
      %s93 = sphi 0, %s90
      %s94 = sphi 0, %s93
      %s110 = sphi 0, %s94
      %s116 = sphi 0, %s118
      %s119 = sphi 0, %s116
      %s120 = sphi 0, %s119
      %s136 = sphi 0, %s120
      %s144 = sphi 0, %s146
      %s147 = sphi 0, %s144
      %s148 = sphi 0, %s147
      %s164 = sphi 0, %s148
    $region4: #{tpu_custom_call.1} parent=1 // loop_header_branch
      %19 = sbr.rel (%p17) target = $region8
    $region5: #{tpu_custom_call.1} parent=1 // loop_body
      %s21 = ssub.s32 %s16, 1
      %s22 = ssub.s32 %s16, 2
      %s29 = sadd.s32 1, %s24
      %p30 = scmp.ge.s32.totalorder %s29, 2
      %s31 = scalar_select %p30, 0, %s29
      %s32 = sadd.s32 1, %s23
      %s33 = scalar_select %p30, %s32, %s23
      %p34 = scmp.ge.s32.totalorder %s33, 1
      %s35 = scalar_select %p34, 0, %s33
      %s36 = ssub.s32 %s23, %s35
      %p37 = scmp.eq.s32.totalorder %s36, 0
      %s39 = sadd.s32 %s38, 1
      %s40 = scalar_select %p37, %s38, %s39
      %p43 = pneg %p37
      %p44 = scmp.eq.s32.totalorder %s16, 1
      %p45 = por %p43, %p44
      %p46 = scmp.ne.s32.totalorder %s38, %s41
      %p47 = scmp.eq.s32.totalorder %s16, 0
      %p48 = por %p46, %p47
      %p49 = scmp.ne.s32.totalorder %s38, %s41
      %p50 = scmp.eq.s32.totalorder %s21, 1
      %p51 = por %p49, %p50
      %p52 = scmp.ne.s32.totalorder %s41, %s42
      %p53 = scmp.eq.s32.totalorder %s21, 0
      %p54 = por %p52, %p53
      %p55 = scmp.ne.s32.totalorder %s41, %s42
      %p56 = scmp.eq.s32.totalorder %s22, 1
      %p57 = por %p55, %p56
      %p59 = scmp.ne.s32.totalorder %s42, %s58
      %p60 = scmp.eq.s32.totalorder %s22, 0
      %p61 = por %p59, %p60
      %s62 = ssub.s32 %s23, %s35
      %p63 = scmp.eq.s32.totalorder %s62, 0
      %s65 = sadd.s32 %s64, 1
      %s66 = scalar_select %p63, %s64, %s65
      %p69 = pneg %p63
      %p70 = scmp.eq.s32.totalorder %s16, 1
      %p71 = por %p69, %p70
      %p72 = scmp.ne.s32.totalorder %s64, %s67
      %p73 = scmp.eq.s32.totalorder %s16, 0
      %p74 = por %p72, %p73
      %p75 = scmp.ne.s32.totalorder %s64, %s67
      %p76 = scmp.eq.s32.totalorder %s21, 1
      %p77 = por %p75, %p76
      %p78 = scmp.ne.s32.totalorder %s67, %s68
      %p79 = scmp.eq.s32.totalorder %s21, 0
      %p80 = por %p78, %p79
      %p81 = scmp.ne.s32.totalorder %s67, %s68
      %p82 = scmp.eq.s32.totalorder %s22, 1
      %p83 = por %p81, %p82
      %p85 = scmp.ne.s32.totalorder %s68, %s84
      %p86 = scmp.eq.s32.totalorder %s22, 0
      %p87 = por %p85, %p86
      %s88 = ssub.s32 %s23, %s35
      %p89 = scmp.eq.s32.totalorder %s88, 0
      %s91 = sadd.s32 %s90, 1
      %s92 = scalar_select %p89, %s90, %s91
      %p95 = pneg %p89
      %p96 = scmp.eq.s32.totalorder %s16, 1
      %p97 = por %p95, %p96
      %p98 = scmp.ne.s32.totalorder %s90, %s93
      %p99 = scmp.eq.s32.totalorder %s16, 0
      %p100 = por %p98, %p99
      %p101 = scmp.ne.s32.totalorder %s90, %s93
      %p102 = scmp.eq.s32.totalorder %s21, 1
      %p103 = por %p101, %p102
      %p104 = scmp.ne.s32.totalorder %s93, %s94
      %p105 = scmp.eq.s32.totalorder %s21, 0
      %p106 = por %p104, %p105
      %p107 = scmp.ne.s32.totalorder %s93, %s94
      %p108 = scmp.eq.s32.totalorder %s22, 1
      %p109 = por %p107, %p108
      %p111 = scmp.ne.s32.totalorder %s94, %s110
      %p112 = scmp.eq.s32.totalorder %s22, 0
      %p113 = por %p111, %p112
      %s114 = ssub.s32 %s24, %s31
      %p115 = scmp.eq.s32.totalorder %s114, 0
      %s117 = sadd.s32 %s116, 1
      %s118 = scalar_select %p115, %s116, %s117
      %p121 = pneg %p115
      %p122 = scmp.eq.s32.totalorder %s16, 1
      %p123 = por %p121, %p122
      %p124 = scmp.ne.s32.totalorder %s116, %s119
      %p125 = scmp.eq.s32.totalorder %s16, 0
      %p126 = por %p124, %p125
      %p127 = scmp.ne.s32.totalorder %s116, %s119
      %p128 = scmp.eq.s32.totalorder %s21, 1
      %p129 = por %p127, %p128
      %p130 = scmp.ne.s32.totalorder %s119, %s120
      %p131 = scmp.eq.s32.totalorder %s21, 0
      %p132 = por %p130, %p131
      %p133 = scmp.ne.s32.totalorder %s119, %s120
      %p134 = scmp.eq.s32.totalorder %s22, 1
      %p135 = por %p133, %p134
      %p137 = scmp.ne.s32.totalorder %s120, %s136
      %p138 = scmp.eq.s32.totalorder %s22, 0
      %p139 = por %p137, %p138
      %s140 = ssub.s32 %s23, %s35
      %s141 = ssub.s32 %s24, %s31
      %s142 = sor.u32 %s140, %s141
      %p143 = scmp.eq.s32.totalorder %s142, 0
      %s145 = sadd.s32 %s144, 1
      %s146 = scalar_select %p143, %s144, %s145
      %p149 = pneg %p143
      %p150 = scmp.eq.s32.totalorder %s16, 1
      %p151 = por %p149, %p150
      %p152 = scmp.ne.s32.totalorder %s144, %s147
      %p153 = scmp.eq.s32.totalorder %s16, 0
      %p154 = por %p152, %p153
      %p155 = scmp.ne.s32.totalorder %s144, %s147
      %p156 = scmp.eq.s32.totalorder %s21, 1
      %p157 = por %p155, %p156
      %p158 = scmp.ne.s32.totalorder %s147, %s148
      %p159 = scmp.eq.s32.totalorder %s21, 0
      %p160 = por %p158, %p159
      %p161 = scmp.ne.s32.totalorder %s147, %s148
      %p162 = scmp.eq.s32.totalorder %s22, 1
      %p163 = por %p161, %p162
      %p165 = scmp.ne.s32.totalorder %s148, %s164
      %p166 = scmp.eq.s32.totalorder %s22, 0
      %p167 = por %p165, %p166
      %p168 = scmp.le.s32.totalorder 1, %s16
      %p169 = scmp.lt.s32.totalorder %s16, 3
      %p170 = pnand %p168, %p169
      %p171 = pneg %p170
      // Predicated region
      $region9: #{tpu_custom_call.1} parent=5 // pred_check
        _
      $region10: #{tpu_custom_call.1} parent=5 // pred_check_branch
        %173 = sbr.rel (%p170) target = $region12
      $region11: #{tpu_custom_call.1} parent=5 // pred_region
        %s174 = ssub.s32 %s16, 1
        // Predicated region
        $region13: #{tpu_custom_call.1} parent=11 // pred_check
          %p175 = pneg %p54
        $region14: #{tpu_custom_call.1} parent=11 // pred_check_branch
          %177 = sbr.rel (%p175) target = $region16
        $region15: #{tpu_custom_call.1} parent=11 // pred_region
          %p178 = scmp.lt.s32.totalorder %s25, 0
          %s179 = scalar_select %p178, %s25, 0
          %s180 = smul.addr %s179, 8
          %s181 = scalar_lea.vmem %s0, %s180
        $region16: #{tpu_custom_call.1} parent=11 // pred_fallthru
          _
        // Predicated region
        $region17: #{tpu_custom_call.1} parent=11 // pred_check
          %p182 = pneg %p80
        $region18: #{tpu_custom_call.1} parent=11 // pred_check_branch
          %184 = sbr.rel (%p182) target = $region20
        $region19: #{tpu_custom_call.1} parent=11 // pred_region
          %p185 = scmp.lt.s32.totalorder %s25, 0
          %s186 = scalar_select %p185, %s25, 0
          %s187 = smul.addr %s186, 8
          %s188 = scalar_lea.vmem %s1, %s187
        $region20: #{tpu_custom_call.1} parent=11 // pred_fallthru
          _
        // Predicated region
        $region21: #{tpu_custom_call.1} parent=11 // pred_check
          %p189 = pneg %p106
        $region22: #{tpu_custom_call.1} parent=11 // pred_check_branch
          %191 = sbr.rel (%p189) target = $region24
        $region23: #{tpu_custom_call.1} parent=11 // pred_region
          %p192 = scmp.lt.s32.totalorder %s25, 0
          %s193 = scalar_select %p192, %s25, 0
          %s194 = smul.addr %s193, 4
          %s195 = scalar_lea.vmem %s2, %s194
        $region24: #{tpu_custom_call.1} parent=11 // pred_fallthru
          _
      $region12: #{tpu_custom_call.1} parent=5 // pred_fallthru
        _
      %p196 = scmp.lt.s32.totalorder %s16, 2
      // Predicated region
      $region25: #{tpu_custom_call.1} parent=5 // pred_check
        %p197 = pneg %p196
      $region26: #{tpu_custom_call.1} parent=5 // pred_check_branch
        %199 = sbr.rel (%p197) target = $region28
      $region27: #{tpu_custom_call.1} parent=5 // pred_region
        // Predicated region
        $region29: #{tpu_custom_call.1} parent=27 // pred_check
          %p200 = pneg %p126
        $region30: #{tpu_custom_call.1} parent=27 // pred_check_branch
          %202 = sbr.rel (%p200) target = $region32
        $region31: #{tpu_custom_call.1} parent=27 // pred_region
          %s203 = sand.u32 %s116, 1
          %s204 = scalar_lea.sflag [#allocation3], %s203
          %s205 = sand.u32 %s116, 1
          %s206 = smul.addr %s205, 1024
          %s207 = scalar_lea.vmem [#allocation2], %s206
          %s208 = smul.u32 16, %s24
          %s210 = ssub.s32 16384, 16384
          %211 = vsyncadd %s204, %s210
          %s212 = smul.addr %s208, 64
          %s213 = scalar_lea.hbm %s3, %s212
          %s214 = sshll.u32 %s207, 4
          %s215 = int_to_ptr.vmem [resolvable:$true] %s214
          %220 = dma.hbm_to_vmem [thread:$0]  %s213, 16384, %s215, %s204, 2048, 1024, 64
        $region32: #{tpu_custom_call.1} parent=27 // pred_fallthru
          _
      $region28: #{tpu_custom_call.1} parent=5 // pred_fallthru
        _
      %p221 = scmp.le.s32.totalorder 1, %s16
      %p222 = scmp.lt.s32.totalorder %s16, 3
      %p223 = pnand %p221, %p222
      %p224 = pneg %p223
      // Predicated region
      $region33: #{tpu_custom_call.1} parent=5 // pred_check
        _
      $region34: #{tpu_custom_call.1} parent=5 // pred_check_branch
        %226 = sbr.rel (%p223) target = $region36
      $region35: #{tpu_custom_call.1} parent=5 // pred_region
        %s227 = ssub.s32 %s16, 1
        %s228 = sand.u32 %s119, 1
        %s229 = scalar_lea.sflag [#allocation3], %s228
        %s230 = sand.u32 %s119, 1
        %s231 = smul.addr %s230, 1024
        %s232 = scalar_lea.vmem [#allocation2], %s231
        // Predicated region
        $region37: #{tpu_custom_call.1} parent=35 // pred_check
          %p233 = pneg %p132
        $region38: #{tpu_custom_call.1} parent=35 // pred_check_branch
          %235 = sbr.rel (%p233) target = $region40
        $region39: #{tpu_custom_call.1} parent=35 // pred_region
          %236 = dma.done %s229, 16384
        $region40: #{tpu_custom_call.1} parent=35 // pred_fallthru
          _
        %p237 = scmp.lt.s32.totalorder %s25, 0
        %s238 = scalar_select %p237, %s25, 0
        %s239 = smul.addr %s238, 8
        %s240 = scalar_lea.vmem %s0, %s239
        %p241 = pneg %p54
        %p242 = pneg %p51
        %p243 = scmp.lt.s32.totalorder %s25, 0
        %s244 = scalar_select %p243, %s25, 0
        %s245 = smul.addr %s244, 8
        %s246 = scalar_lea.vmem %s1, %s245
        %p247 = pneg %p80
        %p248 = pneg %p77
        %p249 = scmp.lt.s32.totalorder %s25, 0
        %s250 = scalar_select %p249, %s25, 0
        %s251 = smul.addr %s250, 4
        %s252 = scalar_lea.vmem %s2, %s251
        %p253 = pneg %p106
        %p254 = pneg %p103
        %s255 = sand.u32 %s119, 1
        %s256 = scalar_lea.sflag [#allocation3], %s255
        %s257 = sand.u32 %s119, 1
        %s258 = smul.addr %s257, 1024
        %s259 = scalar_lea.vmem [#allocation2], %s258
        %p260 = pneg %p132
        %p261 = pneg %p129
        %p262 = pneg %p160
        %p263 = pneg %p157
        %s264 = sand.u32 %s147, 1
        %s265 = scalar_lea.sflag [#allocation4], %s264
        %s266 = sand.u32 %s147, 1
        %s267 = smul.addr %s266, 128
        %s268 = scalar_lea.vmem [#allocation5], %s267
        %p269 = scmp.lt.s32.totalorder %s25, 0
        %s270 = scalar_select %p269, %s25, 0
        %s271 = smul.addr %s270, 8
        %s272 = scalar_lea.vmem %s0, %s271
        %p273 = scmp.lt.s32.totalorder %s25, 0
        %s274 = scalar_select %p273, %s25, 0
        %s275 = smul.addr %s274, 8
        %s276 = scalar_lea.vmem %s1, %s275
        %p277 = scmp.lt.s32.totalorder %s25, 0
        %s278 = scalar_select %p277, %s25, 0
        %s279 = smul.addr %s278, 4
        %s280 = scalar_lea.vmem %s2, %s279
        %s281 = smul.u32 16, %s26
        %s282 = smul.u32 16, %s26
        %v285 = vld [vmem:[%s232] sm:$0xff]
        %v286 = vld [vmem:[%s232 + $0x8] sm:$0xff]
        %v287 = vld [vmem:[%s232 + $0x10] sm:$0xff]
        %v288 = vld [vmem:[%s232 + $0x18] sm:$0xff]
        %v289 = vld [vmem:[%s232 + $0x20] sm:$0xff]
        %v290 = vld [vmem:[%s232 + $0x28] sm:$0xff]
        %v291 = vld [vmem:[%s232 + $0x30] sm:$0xff]
        %v292 = vld [vmem:[%s232 + $0x38] sm:$0xff]
        %v293 = vld [vmem:[%s232 + $0x40] sm:$0xff]
        %v294 = vld [vmem:[%s232 + $0x48] sm:$0xff]
        %v295 = vld [vmem:[%s232 + $0x50] sm:$0xff]
        %v296 = vld [vmem:[%s232 + $0x58] sm:$0xff]
        %v297 = vld [vmem:[%s232 + $0x60] sm:$0xff]
        %v298 = vld [vmem:[%s232 + $0x68] sm:$0xff]
        %v299 = vld [vmem:[%s232 + $0x70] sm:$0xff]
        %v300 = vld [vmem:[%s232 + $0x78] sm:$0xff]
        %v301 = vld [vmem:[%s232 + $0x80] sm:$0xff]
        %v302 = vld [vmem:[%s232 + $0x88] sm:$0xff]
        %v303 = vld [vmem:[%s232 + $0x90] sm:$0xff]
        %v304 = vld [vmem:[%s232 + $0x98] sm:$0xff]
        %v305 = vld [vmem:[%s232 + $0xa0] sm:$0xff]
        %v306 = vld [vmem:[%s232 + $0xa8] sm:$0xff]
        %v307 = vld [vmem:[%s232 + $0xb0] sm:$0xff]
        %v308 = vld [vmem:[%s232 + $0xb8] sm:$0xff]
        %v309 = vld [vmem:[%s232 + $0xc0] sm:$0xff]
        %v310 = vld [vmem:[%s232 + $0xc8] sm:$0xff]
        %v311 = vld [vmem:[%s232 + $0xd0] sm:$0xff]
        %v312 = vld [vmem:[%s232 + $0xd8] sm:$0xff]
        %v313 = vld [vmem:[%s232 + $0xe0] sm:$0xff]
        %v314 = vld [vmem:[%s232 + $0xe8] sm:$0xff]
        %v315 = vld [vmem:[%s232 + $0xf0] sm:$0xff]
        %v316 = vld [vmem:[%s232 + $0xf8] sm:$0xff]
        %v317 = vld [vmem:[%s232 + $0x100] sm:$0xff]
        %v318 = vld [vmem:[%s232 + $0x108] sm:$0xff]
        %v319 = vld [vmem:[%s232 + $0x110] sm:$0xff]
        %v320 = vld [vmem:[%s232 + $0x118] sm:$0xff]
        %v321 = vld [vmem:[%s232 + $0x120] sm:$0xff]
        %v322 = vld [vmem:[%s232 + $0x128] sm:$0xff]
        %v323 = vld [vmem:[%s232 + $0x130] sm:$0xff]
        %v324 = vld [vmem:[%s232 + $0x138] sm:$0xff]
        %v325 = vld [vmem:[%s232 + $0x140] sm:$0xff]
        %v326 = vld [vmem:[%s232 + $0x148] sm:$0xff]
        %v327 = vld [vmem:[%s232 + $0x150] sm:$0xff]
        %v328 = vld [vmem:[%s232 + $0x158] sm:$0xff]
        %v329 = vld [vmem:[%s232 + $0x160] sm:$0xff]
        %v330 = vld [vmem:[%s232 + $0x168] sm:$0xff]
        %v331 = vld [vmem:[%s232 + $0x170] sm:$0xff]
        %v332 = vld [vmem:[%s232 + $0x178] sm:$0xff]
        %v333 = vld [vmem:[%s232 + $0x180] sm:$0xff]
        %v334 = vld [vmem:[%s232 + $0x188] sm:$0xff]
        %v335 = vld [vmem:[%s232 + $0x190] sm:$0xff]
        %v336 = vld [vmem:[%s232 + $0x198] sm:$0xff]
        %v337 = vld [vmem:[%s232 + $0x1a0] sm:$0xff]
        %v338 = vld [vmem:[%s232 + $0x1a8] sm:$0xff]
        %v339 = vld [vmem:[%s232 + $0x1b0] sm:$0xff]
        %v340 = vld [vmem:[%s232 + $0x1b8] sm:$0xff]
        %v341 = vld [vmem:[%s232 + $0x1c0] sm:$0xff]
        %v342 = vld [vmem:[%s232 + $0x1c8] sm:$0xff]
        %v343 = vld [vmem:[%s232 + $0x1d0] sm:$0xff]
        %v344 = vld [vmem:[%s232 + $0x1d8] sm:$0xff]
        %v345 = vld [vmem:[%s232 + $0x1e0] sm:$0xff]
        %v346 = vld [vmem:[%s232 + $0x1e8] sm:$0xff]
        %v347 = vld [vmem:[%s232 + $0x1f0] sm:$0xff]
        %v348 = vld [vmem:[%s232 + $0x1f8] sm:$0xff]
        %v349 = vld [vmem:[%s232 + $0x200] sm:$0xff]
        %v350 = vld [vmem:[%s232 + $0x208] sm:$0xff]
        %v351 = vld [vmem:[%s232 + $0x210] sm:$0xff]
        %v352 = vld [vmem:[%s232 + $0x218] sm:$0xff]
        %v353 = vld [vmem:[%s232 + $0x220] sm:$0xff]
        %v354 = vld [vmem:[%s232 + $0x228] sm:$0xff]
        %v355 = vld [vmem:[%s232 + $0x230] sm:$0xff]
        %v356 = vld [vmem:[%s232 + $0x238] sm:$0xff]
        %v357 = vld [vmem:[%s232 + $0x240] sm:$0xff]
        %v358 = vld [vmem:[%s232 + $0x248] sm:$0xff]
        %v359 = vld [vmem:[%s232 + $0x250] sm:$0xff]
        %v360 = vld [vmem:[%s232 + $0x258] sm:$0xff]
        %v361 = vld [vmem:[%s232 + $0x260] sm:$0xff]
        %v362 = vld [vmem:[%s232 + $0x268] sm:$0xff]
        %v363 = vld [vmem:[%s232 + $0x270] sm:$0xff]
        %v364 = vld [vmem:[%s232 + $0x278] sm:$0xff]
        %v365 = vld [vmem:[%s232 + $0x280] sm:$0xff]
        %v366 = vld [vmem:[%s232 + $0x288] sm:$0xff]
        %v367 = vld [vmem:[%s232 + $0x290] sm:$0xff]
        %v368 = vld [vmem:[%s232 + $0x298] sm:$0xff]
        %v369 = vld [vmem:[%s232 + $0x2a0] sm:$0xff]
        %v370 = vld [vmem:[%s232 + $0x2a8] sm:$0xff]
        %v371 = vld [vmem:[%s232 + $0x2b0] sm:$0xff]
        %v372 = vld [vmem:[%s232 + $0x2b8] sm:$0xff]
        %v373 = vld [vmem:[%s232 + $0x2c0] sm:$0xff]
        %v374 = vld [vmem:[%s232 + $0x2c8] sm:$0xff]
        %v375 = vld [vmem:[%s232 + $0x2d0] sm:$0xff]
        %v376 = vld [vmem:[%s232 + $0x2d8] sm:$0xff]
        %v377 = vld [vmem:[%s232 + $0x2e0] sm:$0xff]
        %v378 = vld [vmem:[%s232 + $0x2e8] sm:$0xff]
        %v379 = vld [vmem:[%s232 + $0x2f0] sm:$0xff]
        %v380 = vld [vmem:[%s232 + $0x2f8] sm:$0xff]
        %v381 = vld [vmem:[%s232 + $0x300] sm:$0xff]
        %v382 = vld [vmem:[%s232 + $0x308] sm:$0xff]
        %v383 = vld [vmem:[%s232 + $0x310] sm:$0xff]
        %v384 = vld [vmem:[%s232 + $0x318] sm:$0xff]
        %v385 = vld [vmem:[%s232 + $0x320] sm:$0xff]
        %v386 = vld [vmem:[%s232 + $0x328] sm:$0xff]
        %v387 = vld [vmem:[%s232 + $0x330] sm:$0xff]
        %v388 = vld [vmem:[%s232 + $0x338] sm:$0xff]
        %v389 = vld [vmem:[%s232 + $0x340] sm:$0xff]
        %v390 = vld [vmem:[%s232 + $0x348] sm:$0xff]
        %v391 = vld [vmem:[%s232 + $0x350] sm:$0xff]
        %v392 = vld [vmem:[%s232 + $0x358] sm:$0xff]
        %v393 = vld [vmem:[%s232 + $0x360] sm:$0xff]
        %v394 = vld [vmem:[%s232 + $0x368] sm:$0xff]
        %v395 = vld [vmem:[%s232 + $0x370] sm:$0xff]
        %v396 = vld [vmem:[%s232 + $0x378] sm:$0xff]
        %v397 = vld [vmem:[%s232 + $0x380] sm:$0xff]
        %v398 = vld [vmem:[%s232 + $0x388] sm:$0xff]
        %v399 = vld [vmem:[%s232 + $0x390] sm:$0xff]
        %v400 = vld [vmem:[%s232 + $0x398] sm:$0xff]
        %v401 = vld [vmem:[%s232 + $0x3a0] sm:$0xff]
        %v402 = vld [vmem:[%s232 + $0x3a8] sm:$0xff]
        %v403 = vld [vmem:[%s232 + $0x3b0] sm:$0xff]
        %v404 = vld [vmem:[%s232 + $0x3b8] sm:$0xff]
        %v405 = vld [vmem:[%s232 + $0x3c0] sm:$0xff]
        %v406 = vld [vmem:[%s232 + $0x3c8] sm:$0xff]
        %v407 = vld [vmem:[%s232 + $0x3d0] sm:$0xff]
        %v408 = vld [vmem:[%s232 + $0x3d8] sm:$0xff]
        %v409 = vld [vmem:[%s232 + $0x3e0] sm:$0xff]
        %v410 = vld [vmem:[%s232 + $0x3e8] sm:$0xff]
        %v411 = vld [vmem:[%s232 + $0x3f0] sm:$0xff]
        %v412 = vld [vmem:[%s232 + $0x3f8] sm:$0xff]
        %v413 = vmul.bf16 %v285, %v285
        %v414 = vmul.bf16 %v286, %v286
        %v415 = vmul.bf16 %v287, %v287
        %v416 = vmul.bf16 %v288, %v288
        %v417 = vmul.bf16 %v289, %v289
        %v418 = vmul.bf16 %v290, %v290
        %v419 = vmul.bf16 %v291, %v291
        %v420 = vmul.bf16 %v292, %v292
        %v421 = vmul.bf16 %v293, %v293
        %v422 = vmul.bf16 %v294, %v294
        %v423 = vmul.bf16 %v295, %v295
        %v424 = vmul.bf16 %v296, %v296
        %v425 = vmul.bf16 %v297, %v297
        %v426 = vmul.bf16 %v298, %v298
        %v427 = vmul.bf16 %v299, %v299
        %v428 = vmul.bf16 %v300, %v300
        %v429 = vmul.bf16 %v301, %v301
        %v430 = vmul.bf16 %v302, %v302
        %v431 = vmul.bf16 %v303, %v303
        %v432 = vmul.bf16 %v304, %v304
        %v433 = vmul.bf16 %v305, %v305
        %v434 = vmul.bf16 %v306, %v306
        %v435 = vmul.bf16 %v307, %v307
        %v436 = vmul.bf16 %v308, %v308
        %v437 = vmul.bf16 %v309, %v309
        %v438 = vmul.bf16 %v310, %v310
        %v439 = vmul.bf16 %v311, %v311
        %v440 = vmul.bf16 %v312, %v312
        %v441 = vmul.bf16 %v313, %v313
        %v442 = vmul.bf16 %v314, %v314
        %v443 = vmul.bf16 %v315, %v315
        %v444 = vmul.bf16 %v316, %v316
        %v445 = vmul.bf16 %v317, %v317
        %v446 = vmul.bf16 %v318, %v318
        %v447 = vmul.bf16 %v319, %v319
        %v448 = vmul.bf16 %v320, %v320
        %v449 = vmul.bf16 %v321, %v321
        %v450 = vmul.bf16 %v322, %v322
        %v451 = vmul.bf16 %v323, %v323
        %v452 = vmul.bf16 %v324, %v324
        %v453 = vmul.bf16 %v325, %v325
        %v454 = vmul.bf16 %v326, %v326
        %v455 = vmul.bf16 %v327, %v327
        %v456 = vmul.bf16 %v328, %v328
        %v457 = vmul.bf16 %v329, %v329
        %v458 = vmul.bf16 %v330, %v330
        %v459 = vmul.bf16 %v331, %v331
        %v460 = vmul.bf16 %v332, %v332
        %v461 = vmul.bf16 %v333, %v333
        %v462 = vmul.bf16 %v334, %v334
        %v463 = vmul.bf16 %v335, %v335
        %v464 = vmul.bf16 %v336, %v336
        %v465 = vmul.bf16 %v337, %v337
        %v466 = vmul.bf16 %v338, %v338
        %v467 = vmul.bf16 %v339, %v339
        %v468 = vmul.bf16 %v340, %v340
        %v469 = vmul.bf16 %v341, %v341
        %v470 = vmul.bf16 %v342, %v342
        %v471 = vmul.bf16 %v343, %v343
        %v472 = vmul.bf16 %v344, %v344
        %v473 = vmul.bf16 %v345, %v345
        %v474 = vmul.bf16 %v346, %v346
        %v475 = vmul.bf16 %v347, %v347
        %v476 = vmul.bf16 %v348, %v348
        %v477 = vmul.bf16 %v349, %v349
        %v478 = vmul.bf16 %v350, %v350
        %v479 = vmul.bf16 %v351, %v351
        %v480 = vmul.bf16 %v352, %v352
        %v481 = vmul.bf16 %v353, %v353
        %v482 = vmul.bf16 %v354, %v354
        %v483 = vmul.bf16 %v355, %v355
        %v484 = vmul.bf16 %v356, %v356
        %v485 = vmul.bf16 %v357, %v357
        %v486 = vmul.bf16 %v358, %v358
        %v487 = vmul.bf16 %v359, %v359
        %v488 = vmul.bf16 %v360, %v360
        %v489 = vmul.bf16 %v361, %v361
        %v490 = vmul.bf16 %v362, %v362
        %v491 = vmul.bf16 %v363, %v363
        %v492 = vmul.bf16 %v364, %v364
        %v493 = vmul.bf16 %v365, %v365
        %v494 = vmul.bf16 %v366, %v366
        %v495 = vmul.bf16 %v367, %v367
        %v496 = vmul.bf16 %v368, %v368
        %v497 = vmul.bf16 %v369, %v369
        %v498 = vmul.bf16 %v370, %v370
        %v499 = vmul.bf16 %v371, %v371
        %v500 = vmul.bf16 %v372, %v372
        %v501 = vmul.bf16 %v373, %v373
        %v502 = vmul.bf16 %v374, %v374
        %v503 = vmul.bf16 %v375, %v375
        %v504 = vmul.bf16 %v376, %v376
        %v505 = vmul.bf16 %v377, %v377
        %v506 = vmul.bf16 %v378, %v378
        %v507 = vmul.bf16 %v379, %v379
        %v508 = vmul.bf16 %v380, %v380
        %v509 = vmul.bf16 %v381, %v381
        %v510 = vmul.bf16 %v382, %v382
        %v511 = vmul.bf16 %v383, %v383
        %v512 = vmul.bf16 %v384, %v384
        %v513 = vmul.bf16 %v385, %v385
        %v514 = vmul.bf16 %v386, %v386
        %v515 = vmul.bf16 %v387, %v387
        %v516 = vmul.bf16 %v388, %v388
        %v517 = vmul.bf16 %v389, %v389
        %v518 = vmul.bf16 %v390, %v390
        %v519 = vmul.bf16 %v391, %v391
        %v520 = vmul.bf16 %v392, %v392
        %v521 = vmul.bf16 %v393, %v393
        %v522 = vmul.bf16 %v394, %v394
        %v523 = vmul.bf16 %v395, %v395
        %v524 = vmul.bf16 %v396, %v396
        %v525 = vmul.bf16 %v397, %v397
        %v526 = vmul.bf16 %v398, %v398
        %v527 = vmul.bf16 %v399, %v399
        %v528 = vmul.bf16 %v400, %v400
        %v529 = vmul.bf16 %v401, %v401
        %v530 = vmul.bf16 %v402, %v402
        %v531 = vmul.bf16 %v403, %v403
        %v532 = vmul.bf16 %v404, %v404
        %v533 = vmul.bf16 %v405, %v405
        %v534 = vmul.bf16 %v406, %v406
        %v535 = vmul.bf16 %v407, %v407
        %v536 = vmul.bf16 %v408, %v408
        %v537 = vmul.bf16 %v409, %v409
        %v538 = vmul.bf16 %v410, %v410
        %v539 = vmul.bf16 %v411, %v411
        %v540 = vmul.bf16 %v412, %v412
        %v669 = vunpack.c.l.b16 %v413
        %v670 = vunpack.c.h.b16 %v413
        %v671 = vunpack.c.l.b16 %v414
        %v672 = vunpack.c.h.b16 %v414
        %v673 = vunpack.c.l.b16 %v415
        %v674 = vunpack.c.h.b16 %v415
        %v675 = vunpack.c.l.b16 %v416
        %v676 = vunpack.c.h.b16 %v416
        %v677 = vunpack.c.l.b16 %v417
        %v678 = vunpack.c.h.b16 %v417
        %v679 = vunpack.c.l.b16 %v418
        %v680 = vunpack.c.h.b16 %v418
        %v681 = vunpack.c.l.b16 %v419
        %v682 = vunpack.c.h.b16 %v419
        %v683 = vunpack.c.l.b16 %v420
        %v684 = vunpack.c.h.b16 %v420
        %v685 = vunpack.c.l.b16 %v421
        %v686 = vunpack.c.h.b16 %v421
        %v687 = vunpack.c.l.b16 %v422
        %v688 = vunpack.c.h.b16 %v422
        %v689 = vunpack.c.l.b16 %v423
        %v690 = vunpack.c.h.b16 %v423
        %v691 = vunpack.c.l.b16 %v424
        %v692 = vunpack.c.h.b16 %v424
        %v693 = vunpack.c.l.b16 %v425
        %v694 = vunpack.c.h.b16 %v425
        %v695 = vunpack.c.l.b16 %v426
        %v696 = vunpack.c.h.b16 %v426
        %v697 = vunpack.c.l.b16 %v427
        %v698 = vunpack.c.h.b16 %v427
        %v699 = vunpack.c.l.b16 %v428
        %v700 = vunpack.c.h.b16 %v428
        %v701 = vunpack.c.l.b16 %v429
        %v702 = vunpack.c.h.b16 %v429
        %v703 = vunpack.c.l.b16 %v430
        %v704 = vunpack.c.h.b16 %v430
        %v705 = vunpack.c.l.b16 %v431
        %v706 = vunpack.c.h.b16 %v431
        %v707 = vunpack.c.l.b16 %v432
        %v708 = vunpack.c.h.b16 %v432
        %v709 = vunpack.c.l.b16 %v433
        %v710 = vunpack.c.h.b16 %v433
        %v711 = vunpack.c.l.b16 %v434
        %v712 = vunpack.c.h.b16 %v434
        %v713 = vunpack.c.l.b16 %v435
        %v714 = vunpack.c.h.b16 %v435
        %v715 = vunpack.c.l.b16 %v436
        %v716 = vunpack.c.h.b16 %v436
        %v717 = vunpack.c.l.b16 %v437
        %v718 = vunpack.c.h.b16 %v437
        %v719 = vunpack.c.l.b16 %v438
        %v720 = vunpack.c.h.b16 %v438
        %v721 = vunpack.c.l.b16 %v439
        %v722 = vunpack.c.h.b16 %v439
        %v723 = vunpack.c.l.b16 %v440
        %v724 = vunpack.c.h.b16 %v440
        %v725 = vunpack.c.l.b16 %v441
        %v726 = vunpack.c.h.b16 %v441
        %v727 = vunpack.c.l.b16 %v442
        %v728 = vunpack.c.h.b16 %v442
        %v729 = vunpack.c.l.b16 %v443
        %v730 = vunpack.c.h.b16 %v443
        %v731 = vunpack.c.l.b16 %v444
        %v732 = vunpack.c.h.b16 %v444
        %v733 = vunpack.c.l.b16 %v445
        %v734 = vunpack.c.h.b16 %v445
        %v735 = vunpack.c.l.b16 %v446
        %v736 = vunpack.c.h.b16 %v446
        %v737 = vunpack.c.l.b16 %v447
        %v738 = vunpack.c.h.b16 %v447
        %v739 = vunpack.c.l.b16 %v448
        %v740 = vunpack.c.h.b16 %v448
        %v741 = vunpack.c.l.b16 %v449
        %v742 = vunpack.c.h.b16 %v449
        %v743 = vunpack.c.l.b16 %v450
        %v744 = vunpack.c.h.b16 %v450
        %v745 = vunpack.c.l.b16 %v451
        %v746 = vunpack.c.h.b16 %v451
        %v747 = vunpack.c.l.b16 %v452
        %v748 = vunpack.c.h.b16 %v452
        %v749 = vunpack.c.l.b16 %v453
        %v750 = vunpack.c.h.b16 %v453
        %v751 = vunpack.c.l.b16 %v454
        %v752 = vunpack.c.h.b16 %v454
        %v753 = vunpack.c.l.b16 %v455
        %v754 = vunpack.c.h.b16 %v455
        %v755 = vunpack.c.l.b16 %v456
        %v756 = vunpack.c.h.b16 %v456
        %v757 = vunpack.c.l.b16 %v457
        %v758 = vunpack.c.h.b16 %v457
        %v759 = vunpack.c.l.b16 %v458
        %v760 = vunpack.c.h.b16 %v458
        %v761 = vunpack.c.l.b16 %v459
        %v762 = vunpack.c.h.b16 %v459
        %v763 = vunpack.c.l.b16 %v460
        %v764 = vunpack.c.h.b16 %v460
        %v765 = vunpack.c.l.b16 %v461
        %v766 = vunpack.c.h.b16 %v461
        %v767 = vunpack.c.l.b16 %v462
        %v768 = vunpack.c.h.b16 %v462
        %v769 = vunpack.c.l.b16 %v463
        %v770 = vunpack.c.h.b16 %v463
        %v771 = vunpack.c.l.b16 %v464
        %v772 = vunpack.c.h.b16 %v464
        %v773 = vunpack.c.l.b16 %v465
        %v774 = vunpack.c.h.b16 %v465
        %v775 = vunpack.c.l.b16 %v466
        %v776 = vunpack.c.h.b16 %v466
        %v777 = vunpack.c.l.b16 %v467
        %v778 = vunpack.c.h.b16 %v467
        %v779 = vunpack.c.l.b16 %v468
        %v780 = vunpack.c.h.b16 %v468
        %v781 = vunpack.c.l.b16 %v469
        %v782 = vunpack.c.h.b16 %v469
        %v783 = vunpack.c.l.b16 %v470
        %v784 = vunpack.c.h.b16 %v470
        %v785 = vunpack.c.l.b16 %v471
        %v786 = vunpack.c.h.b16 %v471
        %v787 = vunpack.c.l.b16 %v472
        %v788 = vunpack.c.h.b16 %v472
        %v789 = vunpack.c.l.b16 %v473
        %v790 = vunpack.c.h.b16 %v473
        %v791 = vunpack.c.l.b16 %v474
        %v792 = vunpack.c.h.b16 %v474
        %v793 = vunpack.c.l.b16 %v475
        %v794 = vunpack.c.h.b16 %v475
        %v795 = vunpack.c.l.b16 %v476
        %v796 = vunpack.c.h.b16 %v476
        %v797 = vunpack.c.l.b16 %v477
        %v798 = vunpack.c.h.b16 %v477
        %v799 = vunpack.c.l.b16 %v478
        %v800 = vunpack.c.h.b16 %v478
        %v801 = vunpack.c.l.b16 %v479
        %v802 = vunpack.c.h.b16 %v479
        %v803 = vunpack.c.l.b16 %v480
        %v804 = vunpack.c.h.b16 %v480
        %v805 = vunpack.c.l.b16 %v481
        %v806 = vunpack.c.h.b16 %v481
        %v807 = vunpack.c.l.b16 %v482
        %v808 = vunpack.c.h.b16 %v482
        %v809 = vunpack.c.l.b16 %v483
        %v810 = vunpack.c.h.b16 %v483
        %v811 = vunpack.c.l.b16 %v484
        %v812 = vunpack.c.h.b16 %v484
        %v813 = vunpack.c.l.b16 %v485
        %v814 = vunpack.c.h.b16 %v485
        %v815 = vunpack.c.l.b16 %v486
        %v816 = vunpack.c.h.b16 %v486
        %v817 = vunpack.c.l.b16 %v487
        %v818 = vunpack.c.h.b16 %v487
        %v819 = vunpack.c.l.b16 %v488
        %v820 = vunpack.c.h.b16 %v488
        %v821 = vunpack.c.l.b16 %v489
        %v822 = vunpack.c.h.b16 %v489
        %v823 = vunpack.c.l.b16 %v490
        %v824 = vunpack.c.h.b16 %v490
        %v825 = vunpack.c.l.b16 %v491
        %v826 = vunpack.c.h.b16 %v491
        %v827 = vunpack.c.l.b16 %v492
        %v828 = vunpack.c.h.b16 %v492
        %v829 = vunpack.c.l.b16 %v493
        %v830 = vunpack.c.h.b16 %v493
        %v831 = vunpack.c.l.b16 %v494
        %v832 = vunpack.c.h.b16 %v494
        %v833 = vunpack.c.l.b16 %v495
        %v834 = vunpack.c.h.b16 %v495
        %v835 = vunpack.c.l.b16 %v496
        %v836 = vunpack.c.h.b16 %v496
        %v837 = vunpack.c.l.b16 %v497
        %v838 = vunpack.c.h.b16 %v497
        %v839 = vunpack.c.l.b16 %v498
        %v840 = vunpack.c.h.b16 %v498
        %v841 = vunpack.c.l.b16 %v499
        %v842 = vunpack.c.h.b16 %v499
        %v843 = vunpack.c.l.b16 %v500
        %v844 = vunpack.c.h.b16 %v500
        %v845 = vunpack.c.l.b16 %v501
        %v846 = vunpack.c.h.b16 %v501
        %v847 = vunpack.c.l.b16 %v502
        %v848 = vunpack.c.h.b16 %v502
        %v849 = vunpack.c.l.b16 %v503
        %v850 = vunpack.c.h.b16 %v503
        %v851 = vunpack.c.l.b16 %v504
        %v852 = vunpack.c.h.b16 %v504
        %v853 = vunpack.c.l.b16 %v505
        %v854 = vunpack.c.h.b16 %v505
        %v855 = vunpack.c.l.b16 %v506
        %v856 = vunpack.c.h.b16 %v506
        %v857 = vunpack.c.l.b16 %v507
        %v858 = vunpack.c.h.b16 %v507
        %v859 = vunpack.c.l.b16 %v508
        %v860 = vunpack.c.h.b16 %v508
        %v861 = vunpack.c.l.b16 %v509
        %v862 = vunpack.c.h.b16 %v509
        %v863 = vunpack.c.l.b16 %v510
        %v864 = vunpack.c.h.b16 %v510
        %v865 = vunpack.c.l.b16 %v511
        %v866 = vunpack.c.h.b16 %v511
        %v867 = vunpack.c.l.b16 %v512
        %v868 = vunpack.c.h.b16 %v512
        %v869 = vunpack.c.l.b16 %v513
        %v870 = vunpack.c.h.b16 %v513
        %v871 = vunpack.c.l.b16 %v514
        %v872 = vunpack.c.h.b16 %v514
        %v873 = vunpack.c.l.b16 %v515
        %v874 = vunpack.c.h.b16 %v515
        %v875 = vunpack.c.l.b16 %v516
        %v876 = vunpack.c.h.b16 %v516
        %v877 = vunpack.c.l.b16 %v517
        %v878 = vunpack.c.h.b16 %v517
        %v879 = vunpack.c.l.b16 %v518
        %v880 = vunpack.c.h.b16 %v518
        %v881 = vunpack.c.l.b16 %v519
        %v882 = vunpack.c.h.b16 %v519
        %v883 = vunpack.c.l.b16 %v520
        %v884 = vunpack.c.h.b16 %v520
        %v885 = vunpack.c.l.b16 %v521
        %v886 = vunpack.c.h.b16 %v521
        %v887 = vunpack.c.l.b16 %v522
        %v888 = vunpack.c.h.b16 %v522
        %v889 = vunpack.c.l.b16 %v523
        %v890 = vunpack.c.h.b16 %v523
        %v891 = vunpack.c.l.b16 %v524
        %v892 = vunpack.c.h.b16 %v524
        %v893 = vunpack.c.l.b16 %v525
        %v894 = vunpack.c.h.b16 %v525
        %v895 = vunpack.c.l.b16 %v526
        %v896 = vunpack.c.h.b16 %v526
        %v897 = vunpack.c.l.b16 %v527
        %v898 = vunpack.c.h.b16 %v527
        %v899 = vunpack.c.l.b16 %v528
        %v900 = vunpack.c.h.b16 %v528
        %v901 = vunpack.c.l.b16 %v529
        %v902 = vunpack.c.h.b16 %v529
        %v903 = vunpack.c.l.b16 %v530
        %v904 = vunpack.c.h.b16 %v530
        %v905 = vunpack.c.l.b16 %v531
        %v906 = vunpack.c.h.b16 %v531
        %v907 = vunpack.c.l.b16 %v532
        %v908 = vunpack.c.h.b16 %v532
        %v909 = vunpack.c.l.b16 %v533
        %v910 = vunpack.c.h.b16 %v533
        %v911 = vunpack.c.l.b16 %v534
        %v912 = vunpack.c.h.b16 %v534
        %v913 = vunpack.c.l.b16 %v535
        %v914 = vunpack.c.h.b16 %v535
        %v915 = vunpack.c.l.b16 %v536
        %v916 = vunpack.c.h.b16 %v536
        %v917 = vunpack.c.l.b16 %v537
        %v918 = vunpack.c.h.b16 %v537
        %v919 = vunpack.c.l.b16 %v538
        %v920 = vunpack.c.h.b16 %v538
        %v921 = vunpack.c.l.b16 %v539
        %v922 = vunpack.c.h.b16 %v539
        %v923 = vunpack.c.l.b16 %v540
        %v924 = vunpack.c.h.b16 %v540
        %v925 = vpack.c.b16 %v685, %v669
        %v926 = vpack.c.b16 %v686, %v670
        %v927 = vpack.c.b16 %v687, %v671
        %v928 = vpack.c.b16 %v688, %v672
        %v929 = vpack.c.b16 %v689, %v673
        %v930 = vpack.c.b16 %v690, %v674
        %v931 = vpack.c.b16 %v691, %v675
        %v932 = vpack.c.b16 %v692, %v676
        %v933 = vpack.c.b16 %v693, %v677
        %v934 = vpack.c.b16 %v694, %v678
        %v935 = vpack.c.b16 %v695, %v679
        %v936 = vpack.c.b16 %v696, %v680
        %v937 = vpack.c.b16 %v697, %v681
        %v938 = vpack.c.b16 %v698, %v682
        %v939 = vpack.c.b16 %v699, %v683
        %v940 = vpack.c.b16 %v700, %v684
        %v941 = vpack.c.b16 %v717, %v701
        %v942 = vpack.c.b16 %v718, %v702
        %v943 = vpack.c.b16 %v719, %v703
        %v944 = vpack.c.b16 %v720, %v704
        %v945 = vpack.c.b16 %v721, %v705
        %v946 = vpack.c.b16 %v722, %v706
        %v947 = vpack.c.b16 %v723, %v707
        %v948 = vpack.c.b16 %v724, %v708
        %v949 = vpack.c.b16 %v725, %v709
        %v950 = vpack.c.b16 %v726, %v710
        %v951 = vpack.c.b16 %v727, %v711
        %v952 = vpack.c.b16 %v728, %v712
        %v953 = vpack.c.b16 %v729, %v713
        %v954 = vpack.c.b16 %v730, %v714
        %v955 = vpack.c.b16 %v731, %v715
        %v956 = vpack.c.b16 %v732, %v716
        %v957 = vpack.c.b16 %v749, %v733
        %v958 = vpack.c.b16 %v750, %v734
        %v959 = vpack.c.b16 %v751, %v735
        %v960 = vpack.c.b16 %v752, %v736
        %v961 = vpack.c.b16 %v753, %v737
        %v962 = vpack.c.b16 %v754, %v738
        %v963 = vpack.c.b16 %v755, %v739
        %v964 = vpack.c.b16 %v756, %v740
        %v965 = vpack.c.b16 %v757, %v741
        %v966 = vpack.c.b16 %v758, %v742
        %v967 = vpack.c.b16 %v759, %v743
        %v968 = vpack.c.b16 %v760, %v744
        %v969 = vpack.c.b16 %v761, %v745
        %v970 = vpack.c.b16 %v762, %v746
        %v971 = vpack.c.b16 %v763, %v747
        %v972 = vpack.c.b16 %v764, %v748
        %v973 = vpack.c.b16 %v781, %v765
        %v974 = vpack.c.b16 %v782, %v766
        %v975 = vpack.c.b16 %v783, %v767
        %v976 = vpack.c.b16 %v784, %v768
        %v977 = vpack.c.b16 %v785, %v769
        %v978 = vpack.c.b16 %v786, %v770
        %v979 = vpack.c.b16 %v787, %v771
        %v980 = vpack.c.b16 %v788, %v772
        %v981 = vpack.c.b16 %v789, %v773
        %v982 = vpack.c.b16 %v790, %v774
        %v983 = vpack.c.b16 %v791, %v775
        %v984 = vpack.c.b16 %v792, %v776
        %v985 = vpack.c.b16 %v793, %v777
        %v986 = vpack.c.b16 %v794, %v778
        %v987 = vpack.c.b16 %v795, %v779
        %v988 = vpack.c.b16 %v796, %v780
        %v989 = vpack.c.b16 %v813, %v797
        %v990 = vpack.c.b16 %v814, %v798
        %v991 = vpack.c.b16 %v815, %v799
        %v992 = vpack.c.b16 %v816, %v800
        %v993 = vpack.c.b16 %v817, %v801
        %v994 = vpack.c.b16 %v818, %v802
        %v995 = vpack.c.b16 %v819, %v803
        %v996 = vpack.c.b16 %v820, %v804
        %v997 = vpack.c.b16 %v821, %v805
        %v998 = vpack.c.b16 %v822, %v806
        %v999 = vpack.c.b16 %v823, %v807
        %v1000 = vpack.c.b16 %v824, %v808
        %v1001 = vpack.c.b16 %v825, %v809
        %v1002 = vpack.c.b16 %v826, %v810
        %v1003 = vpack.c.b16 %v827, %v811
        %v1004 = vpack.c.b16 %v828, %v812
        %v1005 = vpack.c.b16 %v845, %v829
        %v1006 = vpack.c.b16 %v846, %v830
        %v1007 = vpack.c.b16 %v847, %v831
        %v1008 = vpack.c.b16 %v848, %v832
        %v1009 = vpack.c.b16 %v849, %v833
        %v1010 = vpack.c.b16 %v850, %v834
        %v1011 = vpack.c.b16 %v851, %v835
        %v1012 = vpack.c.b16 %v852, %v836
        %v1013 = vpack.c.b16 %v853, %v837
        %v1014 = vpack.c.b16 %v854, %v838
        %v1015 = vpack.c.b16 %v855, %v839
        %v1016 = vpack.c.b16 %v856, %v840
        %v1017 = vpack.c.b16 %v857, %v841
        %v1018 = vpack.c.b16 %v858, %v842
        %v1019 = vpack.c.b16 %v859, %v843
        %v1020 = vpack.c.b16 %v860, %v844
        %v1021 = vpack.c.b16 %v877, %v861
        %v1022 = vpack.c.b16 %v878, %v862
        %v1023 = vpack.c.b16 %v879, %v863
        %v1024 = vpack.c.b16 %v880, %v864
        %v1025 = vpack.c.b16 %v881, %v865
        %v1026 = vpack.c.b16 %v882, %v866
        %v1027 = vpack.c.b16 %v883, %v867
        %v1028 = vpack.c.b16 %v884, %v868
        %v1029 = vpack.c.b16 %v885, %v869
        %v1030 = vpack.c.b16 %v886, %v870
        %v1031 = vpack.c.b16 %v887, %v871
        %v1032 = vpack.c.b16 %v888, %v872
        %v1033 = vpack.c.b16 %v889, %v873
        %v1034 = vpack.c.b16 %v890, %v874
        %v1035 = vpack.c.b16 %v891, %v875
        %v1036 = vpack.c.b16 %v892, %v876
        %v1037 = vpack.c.b16 %v909, %v893
        %v1038 = vpack.c.b16 %v910, %v894
        %v1039 = vpack.c.b16 %v911, %v895
        %v1040 = vpack.c.b16 %v912, %v896
        %v1041 = vpack.c.b16 %v913, %v897
        %v1042 = vpack.c.b16 %v914, %v898
        %v1043 = vpack.c.b16 %v915, %v899
        %v1044 = vpack.c.b16 %v916, %v900
        %v1045 = vpack.c.b16 %v917, %v901
        %v1046 = vpack.c.b16 %v918, %v902
        %v1047 = vpack.c.b16 %v919, %v903
        %v1048 = vpack.c.b16 %v920, %v904
        %v1049 = vpack.c.b16 %v921, %v905
        %v1050 = vpack.c.b16 %v922, %v906
        %v1051 = vpack.c.b16 %v923, %v907
        %v1052 = vpack.c.b16 %v924, %v908
        %1181 = vmatprep.subr.bf16.mxu0 %v926
        %1182 = vmatpush1.bf16.msra.mxu0 %v925
        %1183 = vmatprep.subr.bf16.mxu0 %v942
        %1184 = vmatpush1.bf16.msra.mxu0 %v941
        %1185 = vmatprep.subr.bf16.mxu0 %v958
        %1186 = vmatpush1.bf16.msra.mxu0 %v957
        %1187 = vmatprep.subr.bf16.mxu0 %v974
        %1188 = vmatpush1.bf16.msra.mxu0 %v973
        %1189 = vmatprep.subr.bf16.mxu0 %v990
        %1190 = vmatpush1.bf16.msra.mxu0 %v989
        %1191 = vmatprep.subr.bf16.mxu0 %v1006
        %1192 = vmatpush1.bf16.msra.mxu0 %v1005
        %1193 = vmatprep.subr.bf16.mxu0 %v1022
        %1194 = vmatpush1.bf16.msra.mxu0 %v1021
        %1195 = vmatprep.subr.bf16.mxu0 %v1038
        %1196 = vmatpush1.bf16.msra.mxu0 %v1037
        %1197 = vmatprep.subr.bf16.mxu0 0
        %1198 = vmatpush1.bf16.msra.mxu0 0
        %1199 = vmatprep.subr.bf16.mxu0 0
        %1200 = vmatpush1.bf16.msra.mxu0 0
        %1201 = vmatprep.subr.bf16.mxu0 0
        %1202 = vmatpush1.bf16.msra.mxu0 0
        %1203 = vmatprep.subr.bf16.mxu0 0
        %1204 = vmatpush1.bf16.msra.mxu0 0
        %1205 = vmatprep.subr.bf16.mxu0 0
        %1206 = vmatpush1.bf16.msra.mxu0 0
        %1207 = vmatprep.subr.bf16.mxu0 0
        %1208 = vmatpush1.bf16.msra.mxu0 0
        %1209 = vmatprep.subr.bf16.mxu0 0
        %1210 = vmatpush1.bf16.msra.mxu0 0
        %1211 = vmatprep.subr.bf16.mxu0 0
        %1212 = vmatpush1.bf16.msra.mxu0 0
        %1213 = vmatprep.mubr.bf16.mxu0 0
        %1214 = vmatmul.mubr.bf16.gmra.mrb[0].mxu0 1065369472
        %v1215 = vpop.f32.mrb[0].mxu0
        %v1216 = vadd.f32 0.0, %v1215
        %v1217 = vpop.f32.mrb[0].mxu0
        %v1218 = vadd.f32 0.0, %v1217
        %v1219 = vpop.f32.mrb[0].mxu0
        %v1220 = vpop.f32.mrb[0].mxu0
        %1221 = vdwg.mxu0
        %1222 = vmatprep.subr.bf16.mxu0 %v928
        %1223 = vmatpush1.bf16.msra.mxu0 %v927
        %1224 = vmatprep.subr.bf16.mxu0 %v944
        %1225 = vmatpush1.bf16.msra.mxu0 %v943
        %1226 = vmatprep.subr.bf16.mxu0 %v960
        %1227 = vmatpush1.bf16.msra.mxu0 %v959
        %1228 = vmatprep.subr.bf16.mxu0 %v976
        %1229 = vmatpush1.bf16.msra.mxu0 %v975
        %1230 = vmatprep.subr.bf16.mxu0 %v992
        %1231 = vmatpush1.bf16.msra.mxu0 %v991
        %1232 = vmatprep.subr.bf16.mxu0 %v1008
        %1233 = vmatpush1.bf16.msra.mxu0 %v1007
        %1234 = vmatprep.subr.bf16.mxu0 %v1024
        %1235 = vmatpush1.bf16.msra.mxu0 %v1023
        %1236 = vmatprep.subr.bf16.mxu0 %v1040
        %1237 = vmatpush1.bf16.msra.mxu0 %v1039
        %1238 = vmatprep.subr.bf16.mxu0 0
        %1239 = vmatpush1.bf16.msra.mxu0 0
        %1240 = vmatprep.subr.bf16.mxu0 0
        %1241 = vmatpush1.bf16.msra.mxu0 0
        %1242 = vmatprep.subr.bf16.mxu0 0
        %1243 = vmatpush1.bf16.msra.mxu0 0
        %1244 = vmatprep.subr.bf16.mxu0 0
        %1245 = vmatpush1.bf16.msra.mxu0 0
        %1246 = vmatprep.subr.bf16.mxu0 0
        %1247 = vmatpush1.bf16.msra.mxu0 0
        %1248 = vmatprep.subr.bf16.mxu0 0
        %1249 = vmatpush1.bf16.msra.mxu0 0
        %1250 = vmatprep.subr.bf16.mxu0 0
        %1251 = vmatpush1.bf16.msra.mxu0 0
        %1252 = vmatprep.subr.bf16.mxu0 0
        %1253 = vmatpush1.bf16.msra.mxu0 0
        %1254 = vmatprep.mubr.bf16.mxu0 0
        %1255 = vmatmul.mubr.bf16.gmra.mrb[0].mxu0 1065369472
        %v1256 = vpop.f32.mrb[0].mxu0
        %v1257 = vadd.f32 0.0, %v1256
        %v1258 = vpop.f32.mrb[0].mxu0
        %v1259 = vadd.f32 0.0, %v1258
        %v1260 = vpop.f32.mrb[0].mxu0
        %v1261 = vpop.f32.mrb[0].mxu0
        %1262 = vdwg.mxu0
        %1263 = vmatprep.subr.bf16.mxu0 %v930
        %1264 = vmatpush1.bf16.msra.mxu0 %v929
        %1265 = vmatprep.subr.bf16.mxu0 %v946
        %1266 = vmatpush1.bf16.msra.mxu0 %v945
        %1267 = vmatprep.subr.bf16.mxu0 %v962
        %1268 = vmatpush1.bf16.msra.mxu0 %v961
        %1269 = vmatprep.subr.bf16.mxu0 %v978
        %1270 = vmatpush1.bf16.msra.mxu0 %v977
        %1271 = vmatprep.subr.bf16.mxu0 %v994
        %1272 = vmatpush1.bf16.msra.mxu0 %v993
        %1273 = vmatprep.subr.bf16.mxu0 %v1010
        %1274 = vmatpush1.bf16.msra.mxu0 %v1009
        %1275 = vmatprep.subr.bf16.mxu0 %v1026
        %1276 = vmatpush1.bf16.msra.mxu0 %v1025
        %1277 = vmatprep.subr.bf16.mxu0 %v1042
        %1278 = vmatpush1.bf16.msra.mxu0 %v1041
        %1279 = vmatprep.subr.bf16.mxu0 0
        %1280 = vmatpush1.bf16.msra.mxu0 0
        %1281 = vmatprep.subr.bf16.mxu0 0
        %1282 = vmatpush1.bf16.msra.mxu0 0
        %1283 = vmatprep.subr.bf16.mxu0 0
        %1284 = vmatpush1.bf16.msra.mxu0 0
        %1285 = vmatprep.subr.bf16.mxu0 0
        %1286 = vmatpush1.bf16.msra.mxu0 0
        %1287 = vmatprep.subr.bf16.mxu0 0
        %1288 = vmatpush1.bf16.msra.mxu0 0
        %1289 = vmatprep.subr.bf16.mxu0 0
        %1290 = vmatpush1.bf16.msra.mxu0 0
        %1291 = vmatprep.subr.bf16.mxu0 0
        %1292 = vmatpush1.bf16.msra.mxu0 0
        %1293 = vmatprep.subr.bf16.mxu0 0
        %1294 = vmatpush1.bf16.msra.mxu0 0
        %1295 = vmatprep.mubr.bf16.mxu0 0
        %1296 = vmatmul.mubr.bf16.gmra.mrb[0].mxu0 1065369472
        %v1297 = vpop.f32.mrb[0].mxu0
        %v1298 = vadd.f32 0.0, %v1297
        %v1299 = vpop.f32.mrb[0].mxu0
        %v1300 = vadd.f32 0.0, %v1299
        %v1301 = vpop.f32.mrb[0].mxu0
        %v1302 = vpop.f32.mrb[0].mxu0
        %1303 = vdwg.mxu0
        %1304 = vmatprep.subr.bf16.mxu0 %v932
        %1305 = vmatpush1.bf16.msra.mxu0 %v931
        %1306 = vmatprep.subr.bf16.mxu0 %v948
        %1307 = vmatpush1.bf16.msra.mxu0 %v947
        %1308 = vmatprep.subr.bf16.mxu0 %v964
        %1309 = vmatpush1.bf16.msra.mxu0 %v963
        %1310 = vmatprep.subr.bf16.mxu0 %v980
        %1311 = vmatpush1.bf16.msra.mxu0 %v979
        %1312 = vmatprep.subr.bf16.mxu0 %v996
        %1313 = vmatpush1.bf16.msra.mxu0 %v995
        %1314 = vmatprep.subr.bf16.mxu0 %v1012
        %1315 = vmatpush1.bf16.msra.mxu0 %v1011
        %1316 = vmatprep.subr.bf16.mxu0 %v1028
        %1317 = vmatpush1.bf16.msra.mxu0 %v1027
        %1318 = vmatprep.subr.bf16.mxu0 %v1044
        %1319 = vmatpush1.bf16.msra.mxu0 %v1043
        %1320 = vmatprep.subr.bf16.mxu0 0
        %1321 = vmatpush1.bf16.msra.mxu0 0
        %1322 = vmatprep.subr.bf16.mxu0 0
        %1323 = vmatpush1.bf16.msra.mxu0 0
        %1324 = vmatprep.subr.bf16.mxu0 0
        %1325 = vmatpush1.bf16.msra.mxu0 0
        %1326 = vmatprep.subr.bf16.mxu0 0
        %1327 = vmatpush1.bf16.msra.mxu0 0
        %1328 = vmatprep.subr.bf16.mxu0 0
        %1329 = vmatpush1.bf16.msra.mxu0 0
        %1330 = vmatprep.subr.bf16.mxu0 0
        %1331 = vmatpush1.bf16.msra.mxu0 0
        %1332 = vmatprep.subr.bf16.mxu0 0
        %1333 = vmatpush1.bf16.msra.mxu0 0
        %1334 = vmatprep.subr.bf16.mxu0 0
        %1335 = vmatpush1.bf16.msra.mxu0 0
        %1336 = vmatprep.mubr.bf16.mxu0 0
        %1337 = vmatmul.mubr.bf16.gmra.mrb[0].mxu0 1065369472
        %v1338 = vpop.f32.mrb[0].mxu0
        %v1339 = vadd.f32 0.0, %v1338
        %v1340 = vpop.f32.mrb[0].mxu0
        %v1341 = vadd.f32 0.0, %v1340
        %v1342 = vpop.f32.mrb[0].mxu0
        %v1343 = vpop.f32.mrb[0].mxu0
        %1344 = vdwg.mxu0
        %1345 = vmatprep.subr.bf16.mxu0 %v934
        %1346 = vmatpush1.bf16.msra.mxu0 %v933
        %1347 = vmatprep.subr.bf16.mxu0 %v950
        %1348 = vmatpush1.bf16.msra.mxu0 %v949
        %1349 = vmatprep.subr.bf16.mxu0 %v966
        %1350 = vmatpush1.bf16.msra.mxu0 %v965
        %1351 = vmatprep.subr.bf16.mxu0 %v982
        %1352 = vmatpush1.bf16.msra.mxu0 %v981
        %1353 = vmatprep.subr.bf16.mxu0 %v998
        %1354 = vmatpush1.bf16.msra.mxu0 %v997
        %1355 = vmatprep.subr.bf16.mxu0 %v1014
        %1356 = vmatpush1.bf16.msra.mxu0 %v1013
        %1357 = vmatprep.subr.bf16.mxu0 %v1030
        %1358 = vmatpush1.bf16.msra.mxu0 %v1029
        %1359 = vmatprep.subr.bf16.mxu0 %v1046
        %1360 = vmatpush1.bf16.msra.mxu0 %v1045
        %1361 = vmatprep.subr.bf16.mxu0 0
        %1362 = vmatpush1.bf16.msra.mxu0 0
        %1363 = vmatprep.subr.bf16.mxu0 0
        %1364 = vmatpush1.bf16.msra.mxu0 0
        %1365 = vmatprep.subr.bf16.mxu0 0
        %1366 = vmatpush1.bf16.msra.mxu0 0
        %1367 = vmatprep.subr.bf16.mxu0 0
        %1368 = vmatpush1.bf16.msra.mxu0 0
        %1369 = vmatprep.subr.bf16.mxu0 0
        %1370 = vmatpush1.bf16.msra.mxu0 0
        %1371 = vmatprep.subr.bf16.mxu0 0
        %1372 = vmatpush1.bf16.msra.mxu0 0
        %1373 = vmatprep.subr.bf16.mxu0 0
        %1374 = vmatpush1.bf16.msra.mxu0 0
        %1375 = vmatprep.subr.bf16.mxu0 0
        %1376 = vmatpush1.bf16.msra.mxu0 0
        %1377 = vmatprep.mubr.bf16.mxu0 0
        %1378 = vmatmul.mubr.bf16.gmra.mrb[0].mxu0 1065369472
        %v1379 = vpop.f32.mrb[0].mxu0
        %v1380 = vadd.f32 0.0, %v1379
        %v1381 = vpop.f32.mrb[0].mxu0
        %v1382 = vadd.f32 0.0, %v1381
        %v1383 = vpop.f32.mrb[0].mxu0
        %v1384 = vpop.f32.mrb[0].mxu0
        %1385 = vdwg.mxu0
        %1386 = vmatprep.subr.bf16.mxu0 %v936
        %1387 = vmatpush1.bf16.msra.mxu0 %v935
        %1388 = vmatprep.subr.bf16.mxu0 %v952
        %1389 = vmatpush1.bf16.msra.mxu0 %v951
        %1390 = vmatprep.subr.bf16.mxu0 %v968
        %1391 = vmatpush1.bf16.msra.mxu0 %v967
        %1392 = vmatprep.subr.bf16.mxu0 %v984
        %1393 = vmatpush1.bf16.msra.mxu0 %v983
        %1394 = vmatprep.subr.bf16.mxu0 %v1000
        %1395 = vmatpush1.bf16.msra.mxu0 %v999
        %1396 = vmatprep.subr.bf16.mxu0 %v1016
        %1397 = vmatpush1.bf16.msra.mxu0 %v1015
        %1398 = vmatprep.subr.bf16.mxu0 %v1032
        %1399 = vmatpush1.bf16.msra.mxu0 %v1031
        %1400 = vmatprep.subr.bf16.mxu0 %v1048
        %1401 = vmatpush1.bf16.msra.mxu0 %v1047
        %1402 = vmatprep.subr.bf16.mxu0 0
        %1403 = vmatpush1.bf16.msra.mxu0 0
        %1404 = vmatprep.subr.bf16.mxu0 0
        %1405 = vmatpush1.bf16.msra.mxu0 0
        %1406 = vmatprep.subr.bf16.mxu0 0
        %1407 = vmatpush1.bf16.msra.mxu0 0
        %1408 = vmatprep.subr.bf16.mxu0 0
        %1409 = vmatpush1.bf16.msra.mxu0 0
        %1410 = vmatprep.subr.bf16.mxu0 0
        %1411 = vmatpush1.bf16.msra.mxu0 0
        %1412 = vmatprep.subr.bf16.mxu0 0
        %1413 = vmatpush1.bf16.msra.mxu0 0
        %1414 = vmatprep.subr.bf16.mxu0 0
        %1415 = vmatpush1.bf16.msra.mxu0 0
        %1416 = vmatprep.subr.bf16.mxu0 0
        %1417 = vmatpush1.bf16.msra.mxu0 0
        %1418 = vmatprep.mubr.bf16.mxu0 0
        %1419 = vmatmul.mubr.bf16.gmra.mrb[0].mxu0 1065369472
        %v1420 = vpop.f32.mrb[0].mxu0
        %v1421 = vadd.f32 0.0, %v1420
        %v1422 = vpop.f32.mrb[0].mxu0
        %v1423 = vadd.f32 0.0, %v1422
        %v1424 = vpop.f32.mrb[0].mxu0
        %v1425 = vpop.f32.mrb[0].mxu0
        %1426 = vdwg.mxu0
        %1427 = vmatprep.subr.bf16.mxu0 %v938
        %1428 = vmatpush1.bf16.msra.mxu0 %v937
        %1429 = vmatprep.subr.bf16.mxu0 %v954
        %1430 = vmatpush1.bf16.msra.mxu0 %v953
        %1431 = vmatprep.subr.bf16.mxu0 %v970
        %1432 = vmatpush1.bf16.msra.mxu0 %v969
        %1433 = vmatprep.subr.bf16.mxu0 %v986
        %1434 = vmatpush1.bf16.msra.mxu0 %v985
        %1435 = vmatprep.subr.bf16.mxu0 %v1002
        %1436 = vmatpush1.bf16.msra.mxu0 %v1001
        %1437 = vmatprep.subr.bf16.mxu0 %v1018
        %1438 = vmatpush1.bf16.msra.mxu0 %v1017
        %1439 = vmatprep.subr.bf16.mxu0 %v1034
        %1440 = vmatpush1.bf16.msra.mxu0 %v1033
        %1441 = vmatprep.subr.bf16.mxu0 %v1050
        %1442 = vmatpush1.bf16.msra.mxu0 %v1049
        %1443 = vmatprep.subr.bf16.mxu0 0
        %1444 = vmatpush1.bf16.msra.mxu0 0
        %1445 = vmatprep.subr.bf16.mxu0 0
        %1446 = vmatpush1.bf16.msra.mxu0 0
        %1447 = vmatprep.subr.bf16.mxu0 0
        %1448 = vmatpush1.bf16.msra.mxu0 0
        %1449 = vmatprep.subr.bf16.mxu0 0
        %1450 = vmatpush1.bf16.msra.mxu0 0
        %1451 = vmatprep.subr.bf16.mxu0 0
        %1452 = vmatpush1.bf16.msra.mxu0 0
        %1453 = vmatprep.subr.bf16.mxu0 0
        %1454 = vmatpush1.bf16.msra.mxu0 0
        %1455 = vmatprep.subr.bf16.mxu0 0
        %1456 = vmatpush1.bf16.msra.mxu0 0
        %1457 = vmatprep.subr.bf16.mxu0 0
        %1458 = vmatpush1.bf16.msra.mxu0 0
        %1459 = vmatprep.mubr.bf16.mxu0 0
        %1460 = vmatmul.mubr.bf16.gmra.mrb[0].mxu0 1065369472
        %v1461 = vpop.f32.mrb[0].mxu0
        %v1462 = vadd.f32 0.0, %v1461
        %v1463 = vpop.f32.mrb[0].mxu0
        %v1464 = vadd.f32 0.0, %v1463
        %v1465 = vpop.f32.mrb[0].mxu0
        %v1466 = vpop.f32.mrb[0].mxu0
        %1467 = vdwg.mxu0
        %1468 = vmatprep.subr.bf16.mxu0 %v940
        %1469 = vmatpush1.bf16.msra.mxu0 %v939
        %1470 = vmatprep.subr.bf16.mxu0 %v956
        %1471 = vmatpush1.bf16.msra.mxu0 %v955
        %1472 = vmatprep.subr.bf16.mxu0 %v972
        %1473 = vmatpush1.bf16.msra.mxu0 %v971
        %1474 = vmatprep.subr.bf16.mxu0 %v988
        %1475 = vmatpush1.bf16.msra.mxu0 %v987
        %1476 = vmatprep.subr.bf16.mxu0 %v1004
        %1477 = vmatpush1.bf16.msra.mxu0 %v1003
        %1478 = vmatprep.subr.bf16.mxu0 %v1020
        %1479 = vmatpush1.bf16.msra.mxu0 %v1019
        %1480 = vmatprep.subr.bf16.mxu0 %v1036
        %1481 = vmatpush1.bf16.msra.mxu0 %v1035
        %1482 = vmatprep.subr.bf16.mxu0 %v1052
        %1483 = vmatpush1.bf16.msra.mxu0 %v1051
        %1484 = vmatprep.subr.bf16.mxu0 0
        %1485 = vmatpush1.bf16.msra.mxu0 0
        %1486 = vmatprep.subr.bf16.mxu0 0
        %1487 = vmatpush1.bf16.msra.mxu0 0
        %1488 = vmatprep.subr.bf16.mxu0 0
        %1489 = vmatpush1.bf16.msra.mxu0 0
        %1490 = vmatprep.subr.bf16.mxu0 0
        %1491 = vmatpush1.bf16.msra.mxu0 0
        %1492 = vmatprep.subr.bf16.mxu0 0
        %1493 = vmatpush1.bf16.msra.mxu0 0
        %1494 = vmatprep.subr.bf16.mxu0 0
        %1495 = vmatpush1.bf16.msra.mxu0 0
        %1496 = vmatprep.subr.bf16.mxu0 0
        %1497 = vmatpush1.bf16.msra.mxu0 0
        %1498 = vmatprep.subr.bf16.mxu0 0
        %1499 = vmatpush1.bf16.msra.mxu0 0
        %1500 = vmatprep.mubr.bf16.mxu0 0
        %1501 = vmatmul.mubr.bf16.gmra.mrb[0].mxu0 1065369472
        %v1502 = vpop.f32.mrb[0].mxu0
        %v1503 = vadd.f32 0.0, %v1502
        %v1504 = vpop.f32.mrb[0].mxu0
        %v1505 = vadd.f32 0.0, %v1504
        %v1506 = vpop.f32.mrb[0].mxu0
        %v1507 = vpop.f32.mrb[0].mxu0
        %1508 = vdwg.mxu0
        %v1509 = vrsqrt.pop %v1216
        %v1510 = vrsqrt.pop %v1218
        %v1511 = vrsqrt.pop %v1257
        %v1512 = vrsqrt.pop %v1259
        %v1513 = vrsqrt.pop %v1298
        %v1514 = vrsqrt.pop %v1300
        %v1515 = vrsqrt.pop %v1339
        %v1516 = vrsqrt.pop %v1341
        %v1517 = vrsqrt.pop %v1380
        %v1518 = vrsqrt.pop %v1382
        %v1519 = vrsqrt.pop %v1421
        %v1520 = vrsqrt.pop %v1423
        %v1521 = vrsqrt.pop %v1462
        %v1522 = vrsqrt.pop %v1464
        %v1523 = vrsqrt.pop %v1503
        %v1524 = vrsqrt.pop %v1505
        %v1525 = vmul.f32 %v1509, 64.0
        %v1526 = vmul.f32 %v1510, 64.0
        %v1527 = vmul.f32 %v1511, 64.0
        %v1528 = vmul.f32 %v1512, 64.0
        %v1529 = vmul.f32 %v1513, 64.0
        %v1530 = vmul.f32 %v1514, 64.0
        %v1531 = vmul.f32 %v1515, 64.0
        %v1532 = vmul.f32 %v1516, 64.0
        %v1533 = vmul.f32 %v1517, 64.0
        %v1534 = vmul.f32 %v1518, 64.0
        %v1535 = vmul.f32 %v1519, 64.0
        %v1536 = vmul.f32 %v1520, 64.0
        %v1537 = vmul.f32 %v1521, 64.0
        %v1538 = vmul.f32 %v1522, 64.0
        %v1539 = vmul.f32 %v1523, 64.0
        %v1540 = vmul.f32 %v1524, 64.0
        %v1541 = vld [vmem:[%s280] sm:$0xf]
        %v1670 = vunpack.c.l.b16 %v285
        %v1671 = vunpack.c.h.b16 %v285
        %v1672 = vunpack.c.l.b16 %v286
        %v1673 = vunpack.c.h.b16 %v286
        %v1674 = vunpack.c.l.b16 %v287
        %v1675 = vunpack.c.h.b16 %v287
        %v1676 = vunpack.c.l.b16 %v288
        %v1677 = vunpack.c.h.b16 %v288
        %v1678 = vunpack.c.l.b16 %v289
        %v1679 = vunpack.c.h.b16 %v289
        %v1680 = vunpack.c.l.b16 %v290
        %v1681 = vunpack.c.h.b16 %v290
        %v1682 = vunpack.c.l.b16 %v291
        %v1683 = vunpack.c.h.b16 %v291
        %v1684 = vunpack.c.l.b16 %v292
        %v1685 = vunpack.c.h.b16 %v292
        %v1686 = vunpack.c.l.b16 %v293
        %v1687 = vunpack.c.h.b16 %v293
        %v1688 = vunpack.c.l.b16 %v294
        %v1689 = vunpack.c.h.b16 %v294
        %v1690 = vunpack.c.l.b16 %v295
        %v1691 = vunpack.c.h.b16 %v295
        %v1692 = vunpack.c.l.b16 %v296
        %v1693 = vunpack.c.h.b16 %v296
        %v1694 = vunpack.c.l.b16 %v297
        %v1695 = vunpack.c.h.b16 %v297
        %v1696 = vunpack.c.l.b16 %v298
        %v1697 = vunpack.c.h.b16 %v298
        %v1698 = vunpack.c.l.b16 %v299
        %v1699 = vunpack.c.h.b16 %v299
        %v1700 = vunpack.c.l.b16 %v300
        %v1701 = vunpack.c.h.b16 %v300
        %v1702 = vunpack.c.l.b16 %v301
        %v1703 = vunpack.c.h.b16 %v301
        %v1704 = vunpack.c.l.b16 %v302
        %v1705 = vunpack.c.h.b16 %v302
        %v1706 = vunpack.c.l.b16 %v303
        %v1707 = vunpack.c.h.b16 %v303
        %v1708 = vunpack.c.l.b16 %v304
        %v1709 = vunpack.c.h.b16 %v304
        %v1710 = vunpack.c.l.b16 %v305
        %v1711 = vunpack.c.h.b16 %v305
        %v1712 = vunpack.c.l.b16 %v306
        %v1713 = vunpack.c.h.b16 %v306
        %v1714 = vunpack.c.l.b16 %v307
        %v1715 = vunpack.c.h.b16 %v307
        %v1716 = vunpack.c.l.b16 %v308
        %v1717 = vunpack.c.h.b16 %v308
        %v1718 = vunpack.c.l.b16 %v309
        %v1719 = vunpack.c.h.b16 %v309
        %v1720 = vunpack.c.l.b16 %v310
        %v1721 = vunpack.c.h.b16 %v310
        %v1722 = vunpack.c.l.b16 %v311
        %v1723 = vunpack.c.h.b16 %v311
        %v1724 = vunpack.c.l.b16 %v312
        %v1725 = vunpack.c.h.b16 %v312
        %v1726 = vunpack.c.l.b16 %v313
        %v1727 = vunpack.c.h.b16 %v313
        %v1728 = vunpack.c.l.b16 %v314
        %v1729 = vunpack.c.h.b16 %v314
        %v1730 = vunpack.c.l.b16 %v315
        %v1731 = vunpack.c.h.b16 %v315
        %v1732 = vunpack.c.l.b16 %v316
        %v1733 = vunpack.c.h.b16 %v316
        %v1734 = vunpack.c.l.b16 %v317
        %v1735 = vunpack.c.h.b16 %v317
        %v1736 = vunpack.c.l.b16 %v318
        %v1737 = vunpack.c.h.b16 %v318
        %v1738 = vunpack.c.l.b16 %v319
        %v1739 = vunpack.c.h.b16 %v319
        %v1740 = vunpack.c.l.b16 %v320
        %v1741 = vunpack.c.h.b16 %v320
        %v1742 = vunpack.c.l.b16 %v321
        %v1743 = vunpack.c.h.b16 %v321
        %v1744 = vunpack.c.l.b16 %v322
        %v1745 = vunpack.c.h.b16 %v322
        %v1746 = vunpack.c.l.b16 %v323
        %v1747 = vunpack.c.h.b16 %v323
        %v1748 = vunpack.c.l.b16 %v324
        %v1749 = vunpack.c.h.b16 %v324
        %v1750 = vunpack.c.l.b16 %v325
        %v1751 = vunpack.c.h.b16 %v325
        %v1752 = vunpack.c.l.b16 %v326
        %v1753 = vunpack.c.h.b16 %v326
        %v1754 = vunpack.c.l.b16 %v327
        %v1755 = vunpack.c.h.b16 %v327
        %v1756 = vunpack.c.l.b16 %v328
        %v1757 = vunpack.c.h.b16 %v328
        %v1758 = vunpack.c.l.b16 %v329
        %v1759 = vunpack.c.h.b16 %v329
        %v1760 = vunpack.c.l.b16 %v330
        %v1761 = vunpack.c.h.b16 %v330
        %v1762 = vunpack.c.l.b16 %v331
        %v1763 = vunpack.c.h.b16 %v331
        %v1764 = vunpack.c.l.b16 %v332
        %v1765 = vunpack.c.h.b16 %v332
        %v1766 = vunpack.c.l.b16 %v333
        %v1767 = vunpack.c.h.b16 %v333
        %v1768 = vunpack.c.l.b16 %v334
        %v1769 = vunpack.c.h.b16 %v334
        %v1770 = vunpack.c.l.b16 %v335
        %v1771 = vunpack.c.h.b16 %v335
        %v1772 = vunpack.c.l.b16 %v336
        %v1773 = vunpack.c.h.b16 %v336
        %v1774 = vunpack.c.l.b16 %v337
        %v1775 = vunpack.c.h.b16 %v337
        %v1776 = vunpack.c.l.b16 %v338
        %v1777 = vunpack.c.h.b16 %v338
        %v1778 = vunpack.c.l.b16 %v339
        %v1779 = vunpack.c.h.b16 %v339
        %v1780 = vunpack.c.l.b16 %v340
        %v1781 = vunpack.c.h.b16 %v340
        %v1782 = vunpack.c.l.b16 %v341
        %v1783 = vunpack.c.h.b16 %v341
        %v1784 = vunpack.c.l.b16 %v342
        %v1785 = vunpack.c.h.b16 %v342
        %v1786 = vunpack.c.l.b16 %v343
        %v1787 = vunpack.c.h.b16 %v343
        %v1788 = vunpack.c.l.b16 %v344
        %v1789 = vunpack.c.h.b16 %v344
        %v1790 = vunpack.c.l.b16 %v345
        %v1791 = vunpack.c.h.b16 %v345
        %v1792 = vunpack.c.l.b16 %v346
        %v1793 = vunpack.c.h.b16 %v346
        %v1794 = vunpack.c.l.b16 %v347
        %v1795 = vunpack.c.h.b16 %v347
        %v1796 = vunpack.c.l.b16 %v348
        %v1797 = vunpack.c.h.b16 %v348
        %v1798 = vunpack.c.l.b16 %v349
        %v1799 = vunpack.c.h.b16 %v349
        %v1800 = vunpack.c.l.b16 %v350
        %v1801 = vunpack.c.h.b16 %v350
        %v1802 = vunpack.c.l.b16 %v351
        %v1803 = vunpack.c.h.b16 %v351
        %v1804 = vunpack.c.l.b16 %v352
        %v1805 = vunpack.c.h.b16 %v352
        %v1806 = vunpack.c.l.b16 %v353
        %v1807 = vunpack.c.h.b16 %v353
        %v1808 = vunpack.c.l.b16 %v354
        %v1809 = vunpack.c.h.b16 %v354
        %v1810 = vunpack.c.l.b16 %v355
        %v1811 = vunpack.c.h.b16 %v355
        %v1812 = vunpack.c.l.b16 %v356
        %v1813 = vunpack.c.h.b16 %v356
        %v1814 = vunpack.c.l.b16 %v357
        %v1815 = vunpack.c.h.b16 %v357
        %v1816 = vunpack.c.l.b16 %v358
        %v1817 = vunpack.c.h.b16 %v358
        %v1818 = vunpack.c.l.b16 %v359
        %v1819 = vunpack.c.h.b16 %v359
        %v1820 = vunpack.c.l.b16 %v360
        %v1821 = vunpack.c.h.b16 %v360
        %v1822 = vunpack.c.l.b16 %v361
        %v1823 = vunpack.c.h.b16 %v361
        %v1824 = vunpack.c.l.b16 %v362
        %v1825 = vunpack.c.h.b16 %v362
        %v1826 = vunpack.c.l.b16 %v363
        %v1827 = vunpack.c.h.b16 %v363
        %v1828 = vunpack.c.l.b16 %v364
        %v1829 = vunpack.c.h.b16 %v364
        %v1830 = vunpack.c.l.b16 %v365
        %v1831 = vunpack.c.h.b16 %v365
        %v1832 = vunpack.c.l.b16 %v366
        %v1833 = vunpack.c.h.b16 %v366
        %v1834 = vunpack.c.l.b16 %v367
        %v1835 = vunpack.c.h.b16 %v367
        %v1836 = vunpack.c.l.b16 %v368
        %v1837 = vunpack.c.h.b16 %v368
        %v1838 = vunpack.c.l.b16 %v369
        %v1839 = vunpack.c.h.b16 %v369
        %v1840 = vunpack.c.l.b16 %v370
        %v1841 = vunpack.c.h.b16 %v370
        %v1842 = vunpack.c.l.b16 %v371
        %v1843 = vunpack.c.h.b16 %v371
        %v1844 = vunpack.c.l.b16 %v372
        %v1845 = vunpack.c.h.b16 %v372
        %v1846 = vunpack.c.l.b16 %v373
        %v1847 = vunpack.c.h.b16 %v373
        %v1848 = vunpack.c.l.b16 %v374
        %v1849 = vunpack.c.h.b16 %v374
        %v1850 = vunpack.c.l.b16 %v375
        %v1851 = vunpack.c.h.b16 %v375
        %v1852 = vunpack.c.l.b16 %v376
        %v1853 = vunpack.c.h.b16 %v376
        %v1854 = vunpack.c.l.b16 %v377
        %v1855 = vunpack.c.h.b16 %v377
        %v1856 = vunpack.c.l.b16 %v378
        %v1857 = vunpack.c.h.b16 %v378
        %v1858 = vunpack.c.l.b16 %v379
        %v1859 = vunpack.c.h.b16 %v379
        %v1860 = vunpack.c.l.b16 %v380
        %v1861 = vunpack.c.h.b16 %v380
        %v1862 = vunpack.c.l.b16 %v381
        %v1863 = vunpack.c.h.b16 %v381
        %v1864 = vunpack.c.l.b16 %v382
        %v1865 = vunpack.c.h.b16 %v382
        %v1866 = vunpack.c.l.b16 %v383
        %v1867 = vunpack.c.h.b16 %v383
        %v1868 = vunpack.c.l.b16 %v384
        %v1869 = vunpack.c.h.b16 %v384
        %v1870 = vunpack.c.l.b16 %v385
        %v1871 = vunpack.c.h.b16 %v385
        %v1872 = vunpack.c.l.b16 %v386
        %v1873 = vunpack.c.h.b16 %v386
        %v1874 = vunpack.c.l.b16 %v387
        %v1875 = vunpack.c.h.b16 %v387
        %v1876 = vunpack.c.l.b16 %v388
        %v1877 = vunpack.c.h.b16 %v388
        %v1878 = vunpack.c.l.b16 %v389
        %v1879 = vunpack.c.h.b16 %v389
        %v1880 = vunpack.c.l.b16 %v390
        %v1881 = vunpack.c.h.b16 %v390
        %v1882 = vunpack.c.l.b16 %v391
        %v1883 = vunpack.c.h.b16 %v391
        %v1884 = vunpack.c.l.b16 %v392
        %v1885 = vunpack.c.h.b16 %v392
        %v1886 = vunpack.c.l.b16 %v393
        %v1887 = vunpack.c.h.b16 %v393
        %v1888 = vunpack.c.l.b16 %v394
        %v1889 = vunpack.c.h.b16 %v394
        %v1890 = vunpack.c.l.b16 %v395
        %v1891 = vunpack.c.h.b16 %v395
        %v1892 = vunpack.c.l.b16 %v396
        %v1893 = vunpack.c.h.b16 %v396
        %v1894 = vunpack.c.l.b16 %v397
        %v1895 = vunpack.c.h.b16 %v397
        %v1896 = vunpack.c.l.b16 %v398
        %v1897 = vunpack.c.h.b16 %v398
        %v1898 = vunpack.c.l.b16 %v399
        %v1899 = vunpack.c.h.b16 %v399
        %v1900 = vunpack.c.l.b16 %v400
        %v1901 = vunpack.c.h.b16 %v400
        %v1902 = vunpack.c.l.b16 %v401
        %v1903 = vunpack.c.h.b16 %v401
        %v1904 = vunpack.c.l.b16 %v402
        %v1905 = vunpack.c.h.b16 %v402
        %v1906 = vunpack.c.l.b16 %v403
        %v1907 = vunpack.c.h.b16 %v403
        %v1908 = vunpack.c.l.b16 %v404
        %v1909 = vunpack.c.h.b16 %v404
        %v1910 = vunpack.c.l.b16 %v405
        %v1911 = vunpack.c.h.b16 %v405
        %v1912 = vunpack.c.l.b16 %v406
        %v1913 = vunpack.c.h.b16 %v406
        %v1914 = vunpack.c.l.b16 %v407
        %v1915 = vunpack.c.h.b16 %v407
        %v1916 = vunpack.c.l.b16 %v408
        %v1917 = vunpack.c.h.b16 %v408
        %v1918 = vunpack.c.l.b16 %v409
        %v1919 = vunpack.c.h.b16 %v409
        %v1920 = vunpack.c.l.b16 %v410
        %v1921 = vunpack.c.h.b16 %v410
        %v1922 = vunpack.c.l.b16 %v411
        %v1923 = vunpack.c.h.b16 %v411
        %v1924 = vunpack.c.l.b16 %v412
        %v1925 = vunpack.c.h.b16 %v412
        %v1926 = vpack.c.b16 %v1686, %v1670
        %v1927 = vpack.c.b16 %v1687, %v1671
        %v1928 = vpack.c.b16 %v1688, %v1672
        %v1929 = vpack.c.b16 %v1689, %v1673
        %v1930 = vpack.c.b16 %v1690, %v1674
        %v1931 = vpack.c.b16 %v1691, %v1675
        %v1932 = vpack.c.b16 %v1692, %v1676
        %v1933 = vpack.c.b16 %v1693, %v1677
        %v1934 = vpack.c.b16 %v1694, %v1678
        %v1935 = vpack.c.b16 %v1695, %v1679
        %v1936 = vpack.c.b16 %v1696, %v1680
        %v1937 = vpack.c.b16 %v1697, %v1681
        %v1938 = vpack.c.b16 %v1698, %v1682
        %v1939 = vpack.c.b16 %v1699, %v1683
        %v1940 = vpack.c.b16 %v1700, %v1684
        %v1941 = vpack.c.b16 %v1701, %v1685
        %v1942 = vpack.c.b16 %v1718, %v1702
        %v1943 = vpack.c.b16 %v1719, %v1703
        %v1944 = vpack.c.b16 %v1720, %v1704
        %v1945 = vpack.c.b16 %v1721, %v1705
        %v1946 = vpack.c.b16 %v1722, %v1706
        %v1947 = vpack.c.b16 %v1723, %v1707
        %v1948 = vpack.c.b16 %v1724, %v1708
        %v1949 = vpack.c.b16 %v1725, %v1709
        %v1950 = vpack.c.b16 %v1726, %v1710
        %v1951 = vpack.c.b16 %v1727, %v1711
        %v1952 = vpack.c.b16 %v1728, %v1712
        %v1953 = vpack.c.b16 %v1729, %v1713
        %v1954 = vpack.c.b16 %v1730, %v1714
        %v1955 = vpack.c.b16 %v1731, %v1715
        %v1956 = vpack.c.b16 %v1732, %v1716
        %v1957 = vpack.c.b16 %v1733, %v1717
        %v1958 = vpack.c.b16 %v1750, %v1734
        %v1959 = vpack.c.b16 %v1751, %v1735
        %v1960 = vpack.c.b16 %v1752, %v1736
        %v1961 = vpack.c.b16 %v1753, %v1737
        %v1962 = vpack.c.b16 %v1754, %v1738
        %v1963 = vpack.c.b16 %v1755, %v1739
        %v1964 = vpack.c.b16 %v1756, %v1740
        %v1965 = vpack.c.b16 %v1757, %v1741
        %v1966 = vpack.c.b16 %v1758, %v1742
        %v1967 = vpack.c.b16 %v1759, %v1743
        %v1968 = vpack.c.b16 %v1760, %v1744
        %v1969 = vpack.c.b16 %v1761, %v1745
        %v1970 = vpack.c.b16 %v1762, %v1746
        %v1971 = vpack.c.b16 %v1763, %v1747
        %v1972 = vpack.c.b16 %v1764, %v1748
        %v1973 = vpack.c.b16 %v1765, %v1749
        %v1974 = vpack.c.b16 %v1782, %v1766
        %v1975 = vpack.c.b16 %v1783, %v1767
        %v1976 = vpack.c.b16 %v1784, %v1768
        %v1977 = vpack.c.b16 %v1785, %v1769
        %v1978 = vpack.c.b16 %v1786, %v1770
        %v1979 = vpack.c.b16 %v1787, %v1771
        %v1980 = vpack.c.b16 %v1788, %v1772
        %v1981 = vpack.c.b16 %v1789, %v1773
        %v1982 = vpack.c.b16 %v1790, %v1774
        %v1983 = vpack.c.b16 %v1791, %v1775
        %v1984 = vpack.c.b16 %v1792, %v1776
        %v1985 = vpack.c.b16 %v1793, %v1777
        %v1986 = vpack.c.b16 %v1794, %v1778
        %v1987 = vpack.c.b16 %v1795, %v1779
        %v1988 = vpack.c.b16 %v1796, %v1780
        %v1989 = vpack.c.b16 %v1797, %v1781
        %v1990 = vpack.c.b16 %v1814, %v1798
        %v1991 = vpack.c.b16 %v1815, %v1799
        %v1992 = vpack.c.b16 %v1816, %v1800
        %v1993 = vpack.c.b16 %v1817, %v1801
        %v1994 = vpack.c.b16 %v1818, %v1802
        %v1995 = vpack.c.b16 %v1819, %v1803
        %v1996 = vpack.c.b16 %v1820, %v1804
        %v1997 = vpack.c.b16 %v1821, %v1805
        %v1998 = vpack.c.b16 %v1822, %v1806
        %v1999 = vpack.c.b16 %v1823, %v1807
        %v2000 = vpack.c.b16 %v1824, %v1808
        %v2001 = vpack.c.b16 %v1825, %v1809
        %v2002 = vpack.c.b16 %v1826, %v1810
        %v2003 = vpack.c.b16 %v1827, %v1811
        %v2004 = vpack.c.b16 %v1828, %v1812
        %v2005 = vpack.c.b16 %v1829, %v1813
        %v2006 = vpack.c.b16 %v1846, %v1830
        %v2007 = vpack.c.b16 %v1847, %v1831
        %v2008 = vpack.c.b16 %v1848, %v1832
        %v2009 = vpack.c.b16 %v1849, %v1833
        %v2010 = vpack.c.b16 %v1850, %v1834
        %v2011 = vpack.c.b16 %v1851, %v1835
        %v2012 = vpack.c.b16 %v1852, %v1836
        %v2013 = vpack.c.b16 %v1853, %v1837
        %v2014 = vpack.c.b16 %v1854, %v1838
        %v2015 = vpack.c.b16 %v1855, %v1839
        %v2016 = vpack.c.b16 %v1856, %v1840
        %v2017 = vpack.c.b16 %v1857, %v1841
        %v2018 = vpack.c.b16 %v1858, %v1842
        %v2019 = vpack.c.b16 %v1859, %v1843
        %v2020 = vpack.c.b16 %v1860, %v1844
        %v2021 = vpack.c.b16 %v1861, %v1845
        %v2022 = vpack.c.b16 %v1878, %v1862
        %v2023 = vpack.c.b16 %v1879, %v1863
        %v2024 = vpack.c.b16 %v1880, %v1864
        %v2025 = vpack.c.b16 %v1881, %v1865
        %v2026 = vpack.c.b16 %v1882, %v1866
        %v2027 = vpack.c.b16 %v1883, %v1867
        %v2028 = vpack.c.b16 %v1884, %v1868
        %v2029 = vpack.c.b16 %v1885, %v1869
        %v2030 = vpack.c.b16 %v1886, %v1870
        %v2031 = vpack.c.b16 %v1887, %v1871
        %v2032 = vpack.c.b16 %v1888, %v1872
        %v2033 = vpack.c.b16 %v1889, %v1873
        %v2034 = vpack.c.b16 %v1890, %v1874
        %v2035 = vpack.c.b16 %v1891, %v1875
        %v2036 = vpack.c.b16 %v1892, %v1876
        %v2037 = vpack.c.b16 %v1893, %v1877
        %v2038 = vpack.c.b16 %v1910, %v1894
        %v2039 = vpack.c.b16 %v1911, %v1895
        %v2040 = vpack.c.b16 %v1912, %v1896
        %v2041 = vpack.c.b16 %v1913, %v1897
        %v2042 = vpack.c.b16 %v1914, %v1898
        %v2043 = vpack.c.b16 %v1915, %v1899
        %v2044 = vpack.c.b16 %v1916, %v1900
        %v2045 = vpack.c.b16 %v1917, %v1901
        %v2046 = vpack.c.b16 %v1918, %v1902
        %v2047 = vpack.c.b16 %v1919, %v1903
        %v2048 = vpack.c.b16 %v1920, %v1904
        %v2049 = vpack.c.b16 %v1921, %v1905
        %v2050 = vpack.c.b16 %v1922, %v1906
        %v2051 = vpack.c.b16 %v1923, %v1907
        %v2052 = vpack.c.b16 %v1924, %v1908
        %v2053 = vpack.c.b16 %v1925, %v1909
        %2182 = vmatprep.subr.bf16.mxu0 %v1927
        %2183 = vmatpush1.bf16.msra.mxu0 %v1926
        %2184 = vmatprep.subr.bf16.mxu0 %v1943
        %2185 = vmatpush1.bf16.msra.mxu0 %v1942
        %2186 = vmatprep.subr.bf16.mxu0 %v1959
        %2187 = vmatpush1.bf16.msra.mxu0 %v1958
        %2188 = vmatprep.subr.bf16.mxu0 %v1975
        %2189 = vmatpush1.bf16.msra.mxu0 %v1974
        %2190 = vmatprep.subr.bf16.mxu0 %v1991
        %2191 = vmatpush1.bf16.msra.mxu0 %v1990
        %2192 = vmatprep.subr.bf16.mxu0 %v2007
        %2193 = vmatpush1.bf16.msra.mxu0 %v2006
        %2194 = vmatprep.subr.bf16.mxu0 %v2023
        %2195 = vmatpush1.bf16.msra.mxu0 %v2022
        %2196 = vmatprep.subr.bf16.mxu0 %v2039
        %2197 = vmatpush1.bf16.msra.mxu0 %v2038
        %2198 = vmatprep.subr.bf16.mxu0 0
        %2199 = vmatpush1.bf16.msra.mxu0 0
        %2200 = vmatprep.subr.bf16.mxu0 0
        %2201 = vmatpush1.bf16.msra.mxu0 0
        %2202 = vmatprep.subr.bf16.mxu0 0
        %2203 = vmatpush1.bf16.msra.mxu0 0
        %2204 = vmatprep.subr.bf16.mxu0 0
        %2205 = vmatpush1.bf16.msra.mxu0 0
        %2206 = vmatprep.subr.bf16.mxu0 0
        %2207 = vmatpush1.bf16.msra.mxu0 0
        %2208 = vmatprep.subr.bf16.mxu0 0
        %2209 = vmatpush1.bf16.msra.mxu0 0
        %2210 = vmatprep.subr.bf16.mxu0 0
        %2211 = vmatpush1.bf16.msra.mxu0 0
        %2212 = vmatprep.subr.bf16.mxu0 0
        %2213 = vmatpush1.bf16.msra.mxu0 0
        %2214 = vmatprep.mubr.bf16.mxu0 0
        %2215 = vmatmul.mubr.bf16.gmra.mrb[0].mxu0 %v1541
        %v2216 = vpop.f32.mrb[0].mxu0
        %v2217 = vadd.f32 0.0, %v2216
        %v2218 = vpop.f32.mrb[0].mxu0
        %v2219 = vadd.f32 0.0, %v2218
        %v2220 = vpop.f32.mrb[0].mxu0
        %v2221 = vpop.f32.mrb[0].mxu0
        %2222 = vdwg.mxu0
        %2223 = vmatprep.subr.bf16.mxu0 %v1929
        %2224 = vmatpush1.bf16.msra.mxu0 %v1928
        %2225 = vmatprep.subr.bf16.mxu0 %v1945
        %2226 = vmatpush1.bf16.msra.mxu0 %v1944
        %2227 = vmatprep.subr.bf16.mxu0 %v1961
        %2228 = vmatpush1.bf16.msra.mxu0 %v1960
        %2229 = vmatprep.subr.bf16.mxu0 %v1977
        %2230 = vmatpush1.bf16.msra.mxu0 %v1976
        %2231 = vmatprep.subr.bf16.mxu0 %v1993
        %2232 = vmatpush1.bf16.msra.mxu0 %v1992
        %2233 = vmatprep.subr.bf16.mxu0 %v2009
        %2234 = vmatpush1.bf16.msra.mxu0 %v2008
        %2235 = vmatprep.subr.bf16.mxu0 %v2025
        %2236 = vmatpush1.bf16.msra.mxu0 %v2024
        %2237 = vmatprep.subr.bf16.mxu0 %v2041
        %2238 = vmatpush1.bf16.msra.mxu0 %v2040
        %2239 = vmatprep.subr.bf16.mxu0 0
        %2240 = vmatpush1.bf16.msra.mxu0 0
        %2241 = vmatprep.subr.bf16.mxu0 0
        %2242 = vmatpush1.bf16.msra.mxu0 0
        %2243 = vmatprep.subr.bf16.mxu0 0
        %2244 = vmatpush1.bf16.msra.mxu0 0
        %2245 = vmatprep.subr.bf16.mxu0 0
        %2246 = vmatpush1.bf16.msra.mxu0 0
        %2247 = vmatprep.subr.bf16.mxu0 0
        %2248 = vmatpush1.bf16.msra.mxu0 0
        %2249 = vmatprep.subr.bf16.mxu0 0
        %2250 = vmatpush1.bf16.msra.mxu0 0
        %2251 = vmatprep.subr.bf16.mxu0 0
        %2252 = vmatpush1.bf16.msra.mxu0 0
        %2253 = vmatprep.subr.bf16.mxu0 0
        %2254 = vmatpush1.bf16.msra.mxu0 0
        %2255 = vmatprep.mubr.bf16.mxu0 0
        %2256 = vmatmul.mubr.bf16.gmra.mrb[0].mxu0 %v1541
        %v2257 = vpop.f32.mrb[0].mxu0
        %v2258 = vadd.f32 0.0, %v2257
        %v2259 = vpop.f32.mrb[0].mxu0
        %v2260 = vadd.f32 0.0, %v2259
        %v2261 = vpop.f32.mrb[0].mxu0
        %v2262 = vpop.f32.mrb[0].mxu0
        %2263 = vdwg.mxu0
        %2264 = vmatprep.subr.bf16.mxu0 %v1931
        %2265 = vmatpush1.bf16.msra.mxu0 %v1930
        %2266 = vmatprep.subr.bf16.mxu0 %v1947
        %2267 = vmatpush1.bf16.msra.mxu0 %v1946
        %2268 = vmatprep.subr.bf16.mxu0 %v1963
        %2269 = vmatpush1.bf16.msra.mxu0 %v1962
        %2270 = vmatprep.subr.bf16.mxu0 %v1979
        %2271 = vmatpush1.bf16.msra.mxu0 %v1978
        %2272 = vmatprep.subr.bf16.mxu0 %v1995
        %2273 = vmatpush1.bf16.msra.mxu0 %v1994
        %2274 = vmatprep.subr.bf16.mxu0 %v2011
        %2275 = vmatpush1.bf16.msra.mxu0 %v2010
        %2276 = vmatprep.subr.bf16.mxu0 %v2027
        %2277 = vmatpush1.bf16.msra.mxu0 %v2026
        %2278 = vmatprep.subr.bf16.mxu0 %v2043
        %2279 = vmatpush1.bf16.msra.mxu0 %v2042
        %2280 = vmatprep.subr.bf16.mxu0 0
        %2281 = vmatpush1.bf16.msra.mxu0 0
        %2282 = vmatprep.subr.bf16.mxu0 0
        %2283 = vmatpush1.bf16.msra.mxu0 0
        %2284 = vmatprep.subr.bf16.mxu0 0
        %2285 = vmatpush1.bf16.msra.mxu0 0
        %2286 = vmatprep.subr.bf16.mxu0 0
        %2287 = vmatpush1.bf16.msra.mxu0 0
        %2288 = vmatprep.subr.bf16.mxu0 0
        %2289 = vmatpush1.bf16.msra.mxu0 0
        %2290 = vmatprep.subr.bf16.mxu0 0
        %2291 = vmatpush1.bf16.msra.mxu0 0
        %2292 = vmatprep.subr.bf16.mxu0 0
        %2293 = vmatpush1.bf16.msra.mxu0 0
        %2294 = vmatprep.subr.bf16.mxu0 0
        %2295 = vmatpush1.bf16.msra.mxu0 0
        %2296 = vmatprep.mubr.bf16.mxu0 0
        %2297 = vmatmul.mubr.bf16.gmra.mrb[0].mxu0 %v1541
        %v2298 = vpop.f32.mrb[0].mxu0
        %v2299 = vadd.f32 0.0, %v2298
        %v2300 = vpop.f32.mrb[0].mxu0
        %v2301 = vadd.f32 0.0, %v2300
        %v2302 = vpop.f32.mrb[0].mxu0
        %v2303 = vpop.f32.mrb[0].mxu0
        %2304 = vdwg.mxu0
        %2305 = vmatprep.subr.bf16.mxu0 %v1933
        %2306 = vmatpush1.bf16.msra.mxu0 %v1932
        %2307 = vmatprep.subr.bf16.mxu0 %v1949
        %2308 = vmatpush1.bf16.msra.mxu0 %v1948
        %2309 = vmatprep.subr.bf16.mxu0 %v1965
        %2310 = vmatpush1.bf16.msra.mxu0 %v1964
        %2311 = vmatprep.subr.bf16.mxu0 %v1981
        %2312 = vmatpush1.bf16.msra.mxu0 %v1980
        %2313 = vmatprep.subr.bf16.mxu0 %v1997
        %2314 = vmatpush1.bf16.msra.mxu0 %v1996
        %2315 = vmatprep.subr.bf16.mxu0 %v2013
        %2316 = vmatpush1.bf16.msra.mxu0 %v2012
        %2317 = vmatprep.subr.bf16.mxu0 %v2029
        %2318 = vmatpush1.bf16.msra.mxu0 %v2028
        %2319 = vmatprep.subr.bf16.mxu0 %v2045
        %2320 = vmatpush1.bf16.msra.mxu0 %v2044
        %2321 = vmatprep.subr.bf16.mxu0 0
        %2322 = vmatpush1.bf16.msra.mxu0 0
        %2323 = vmatprep.subr.bf16.mxu0 0
        %2324 = vmatpush1.bf16.msra.mxu0 0
        %2325 = vmatprep.subr.bf16.mxu0 0
        %2326 = vmatpush1.bf16.msra.mxu0 0
        %2327 = vmatprep.subr.bf16.mxu0 0
        %2328 = vmatpush1.bf16.msra.mxu0 0
        %2329 = vmatprep.subr.bf16.mxu0 0
        %2330 = vmatpush1.bf16.msra.mxu0 0
        %2331 = vmatprep.subr.bf16.mxu0 0
        %2332 = vmatpush1.bf16.msra.mxu0 0
        %2333 = vmatprep.subr.bf16.mxu0 0
        %2334 = vmatpush1.bf16.msra.mxu0 0
        %2335 = vmatprep.subr.bf16.mxu0 0
        %2336 = vmatpush1.bf16.msra.mxu0 0
        %2337 = vmatprep.mubr.bf16.mxu0 0
        %2338 = vmatmul.mubr.bf16.gmra.mrb[0].mxu0 %v1541
        %v2339 = vpop.f32.mrb[0].mxu0
        %v2340 = vadd.f32 0.0, %v2339
        %v2341 = vpop.f32.mrb[0].mxu0
        %v2342 = vadd.f32 0.0, %v2341
        %v2343 = vpop.f32.mrb[0].mxu0
        %v2344 = vpop.f32.mrb[0].mxu0
        %2345 = vdwg.mxu0
        %2346 = vmatprep.subr.bf16.mxu0 %v1935
        %2347 = vmatpush1.bf16.msra.mxu0 %v1934
        %2348 = vmatprep.subr.bf16.mxu0 %v1951
        %2349 = vmatpush1.bf16.msra.mxu0 %v1950
        %2350 = vmatprep.subr.bf16.mxu0 %v1967
        %2351 = vmatpush1.bf16.msra.mxu0 %v1966
        %2352 = vmatprep.subr.bf16.mxu0 %v1983
        %2353 = vmatpush1.bf16.msra.mxu0 %v1982
        %2354 = vmatprep.subr.bf16.mxu0 %v1999
        %2355 = vmatpush1.bf16.msra.mxu0 %v1998
        %2356 = vmatprep.subr.bf16.mxu0 %v2015
        %2357 = vmatpush1.bf16.msra.mxu0 %v2014
        %2358 = vmatprep.subr.bf16.mxu0 %v2031
        %2359 = vmatpush1.bf16.msra.mxu0 %v2030
        %2360 = vmatprep.subr.bf16.mxu0 %v2047
        %2361 = vmatpush1.bf16.msra.mxu0 %v2046
        %2362 = vmatprep.subr.bf16.mxu0 0
        %2363 = vmatpush1.bf16.msra.mxu0 0
        %2364 = vmatprep.subr.bf16.mxu0 0
        %2365 = vmatpush1.bf16.msra.mxu0 0
        %2366 = vmatprep.subr.bf16.mxu0 0
        %2367 = vmatpush1.bf16.msra.mxu0 0
        %2368 = vmatprep.subr.bf16.mxu0 0
        %2369 = vmatpush1.bf16.msra.mxu0 0
        %2370 = vmatprep.subr.bf16.mxu0 0
        %2371 = vmatpush1.bf16.msra.mxu0 0
        %2372 = vmatprep.subr.bf16.mxu0 0
        %2373 = vmatpush1.bf16.msra.mxu0 0
        %2374 = vmatprep.subr.bf16.mxu0 0
        %2375 = vmatpush1.bf16.msra.mxu0 0
        %2376 = vmatprep.subr.bf16.mxu0 0
        %2377 = vmatpush1.bf16.msra.mxu0 0
        %2378 = vmatprep.mubr.bf16.mxu0 0
        %2379 = vmatmul.mubr.bf16.gmra.mrb[0].mxu0 %v1541
        %v2380 = vpop.f32.mrb[0].mxu0
        %v2381 = vadd.f32 0.0, %v2380
        %v2382 = vpop.f32.mrb[0].mxu0
        %v2383 = vadd.f32 0.0, %v2382
        %v2384 = vpop.f32.mrb[0].mxu0
        %v2385 = vpop.f32.mrb[0].mxu0
        %2386 = vdwg.mxu0
        %2387 = vmatprep.subr.bf16.mxu0 %v1937
        %2388 = vmatpush1.bf16.msra.mxu0 %v1936
        %2389 = vmatprep.subr.bf16.mxu0 %v1953
        %2390 = vmatpush1.bf16.msra.mxu0 %v1952
        %2391 = vmatprep.subr.bf16.mxu0 %v1969
        %2392 = vmatpush1.bf16.msra.mxu0 %v1968
        %2393 = vmatprep.subr.bf16.mxu0 %v1985
        %2394 = vmatpush1.bf16.msra.mxu0 %v1984
        %2395 = vmatprep.subr.bf16.mxu0 %v2001
        %2396 = vmatpush1.bf16.msra.mxu0 %v2000
        %2397 = vmatprep.subr.bf16.mxu0 %v2017
        %2398 = vmatpush1.bf16.msra.mxu0 %v2016
        %2399 = vmatprep.subr.bf16.mxu0 %v2033
        %2400 = vmatpush1.bf16.msra.mxu0 %v2032
        %2401 = vmatprep.subr.bf16.mxu0 %v2049
        %2402 = vmatpush1.bf16.msra.mxu0 %v2048
        %2403 = vmatprep.subr.bf16.mxu0 0
        %2404 = vmatpush1.bf16.msra.mxu0 0
        %2405 = vmatprep.subr.bf16.mxu0 0
        %2406 = vmatpush1.bf16.msra.mxu0 0
        %2407 = vmatprep.subr.bf16.mxu0 0
        %2408 = vmatpush1.bf16.msra.mxu0 0
        %2409 = vmatprep.subr.bf16.mxu0 0
        %2410 = vmatpush1.bf16.msra.mxu0 0
        %2411 = vmatprep.subr.bf16.mxu0 0
        %2412 = vmatpush1.bf16.msra.mxu0 0
        %2413 = vmatprep.subr.bf16.mxu0 0
        %2414 = vmatpush1.bf16.msra.mxu0 0
        %2415 = vmatprep.subr.bf16.mxu0 0
        %2416 = vmatpush1.bf16.msra.mxu0 0
        %2417 = vmatprep.subr.bf16.mxu0 0
        %2418 = vmatpush1.bf16.msra.mxu0 0
        %2419 = vmatprep.mubr.bf16.mxu0 0
        %2420 = vmatmul.mubr.bf16.gmra.mrb[0].mxu0 %v1541
        %v2421 = vpop.f32.mrb[0].mxu0
        %v2422 = vadd.f32 0.0, %v2421
        %v2423 = vpop.f32.mrb[0].mxu0
        %v2424 = vadd.f32 0.0, %v2423
        %v2425 = vpop.f32.mrb[0].mxu0
        %v2426 = vpop.f32.mrb[0].mxu0
        %2427 = vdwg.mxu0
        %2428 = vmatprep.subr.bf16.mxu0 %v1939
        %2429 = vmatpush1.bf16.msra.mxu0 %v1938
        %2430 = vmatprep.subr.bf16.mxu0 %v1955
        %2431 = vmatpush1.bf16.msra.mxu0 %v1954
        %2432 = vmatprep.subr.bf16.mxu0 %v1971
        %2433 = vmatpush1.bf16.msra.mxu0 %v1970
        %2434 = vmatprep.subr.bf16.mxu0 %v1987
        %2435 = vmatpush1.bf16.msra.mxu0 %v1986
        %2436 = vmatprep.subr.bf16.mxu0 %v2003
        %2437 = vmatpush1.bf16.msra.mxu0 %v2002
        %2438 = vmatprep.subr.bf16.mxu0 %v2019
        %2439 = vmatpush1.bf16.msra.mxu0 %v2018
        %2440 = vmatprep.subr.bf16.mxu0 %v2035
        %2441 = vmatpush1.bf16.msra.mxu0 %v2034
        %2442 = vmatprep.subr.bf16.mxu0 %v2051
        %2443 = vmatpush1.bf16.msra.mxu0 %v2050
        %2444 = vmatprep.subr.bf16.mxu0 0
        %2445 = vmatpush1.bf16.msra.mxu0 0
        %2446 = vmatprep.subr.bf16.mxu0 0
        %2447 = vmatpush1.bf16.msra.mxu0 0
        %2448 = vmatprep.subr.bf16.mxu0 0
        %2449 = vmatpush1.bf16.msra.mxu0 0
        %2450 = vmatprep.subr.bf16.mxu0 0
        %2451 = vmatpush1.bf16.msra.mxu0 0
        %2452 = vmatprep.subr.bf16.mxu0 0
        %2453 = vmatpush1.bf16.msra.mxu0 0
        %2454 = vmatprep.subr.bf16.mxu0 0
        %2455 = vmatpush1.bf16.msra.mxu0 0
        %2456 = vmatprep.subr.bf16.mxu0 0
        %2457 = vmatpush1.bf16.msra.mxu0 0
        %2458 = vmatprep.subr.bf16.mxu0 0
        %2459 = vmatpush1.bf16.msra.mxu0 0
        %2460 = vmatprep.mubr.bf16.mxu0 0
        %2461 = vmatmul.mubr.bf16.gmra.mrb[0].mxu0 %v1541
        %v2462 = vpop.f32.mrb[0].mxu0
        %v2463 = vadd.f32 0.0, %v2462
        %v2464 = vpop.f32.mrb[0].mxu0
        %v2465 = vadd.f32 0.0, %v2464
        %v2466 = vpop.f32.mrb[0].mxu0
        %v2467 = vpop.f32.mrb[0].mxu0
        %2468 = vdwg.mxu0
        %2469 = vmatprep.subr.bf16.mxu0 %v1941
        %2470 = vmatpush1.bf16.msra.mxu0 %v1940
        %2471 = vmatprep.subr.bf16.mxu0 %v1957
        %2472 = vmatpush1.bf16.msra.mxu0 %v1956
        %2473 = vmatprep.subr.bf16.mxu0 %v1973
        %2474 = vmatpush1.bf16.msra.mxu0 %v1972
        %2475 = vmatprep.subr.bf16.mxu0 %v1989
        %2476 = vmatpush1.bf16.msra.mxu0 %v1988
        %2477 = vmatprep.subr.bf16.mxu0 %v2005
        %2478 = vmatpush1.bf16.msra.mxu0 %v2004
        %2479 = vmatprep.subr.bf16.mxu0 %v2021
        %2480 = vmatpush1.bf16.msra.mxu0 %v2020
        %2481 = vmatprep.subr.bf16.mxu0 %v2037
        %2482 = vmatpush1.bf16.msra.mxu0 %v2036
        %2483 = vmatprep.subr.bf16.mxu0 %v2053
        %2484 = vmatpush1.bf16.msra.mxu0 %v2052
        %2485 = vmatprep.subr.bf16.mxu0 0
        %2486 = vmatpush1.bf16.msra.mxu0 0
        %2487 = vmatprep.subr.bf16.mxu0 0
        %2488 = vmatpush1.bf16.msra.mxu0 0
        %2489 = vmatprep.subr.bf16.mxu0 0
        %2490 = vmatpush1.bf16.msra.mxu0 0
        %2491 = vmatprep.subr.bf16.mxu0 0
        %2492 = vmatpush1.bf16.msra.mxu0 0
        %2493 = vmatprep.subr.bf16.mxu0 0
        %2494 = vmatpush1.bf16.msra.mxu0 0
        %2495 = vmatprep.subr.bf16.mxu0 0
        %2496 = vmatpush1.bf16.msra.mxu0 0
        %2497 = vmatprep.subr.bf16.mxu0 0
        %2498 = vmatpush1.bf16.msra.mxu0 0
        %2499 = vmatprep.subr.bf16.mxu0 0
        %2500 = vmatpush1.bf16.msra.mxu0 0
        %2501 = vmatprep.mubr.bf16.mxu0 0
        %2502 = vmatmul.mubr.bf16.gmra.mrb[0].mxu0 %v1541
        %v2503 = vpop.f32.mrb[0].mxu0
        %v2504 = vadd.f32 0.0, %v2503
        %v2505 = vpop.f32.mrb[0].mxu0
        %v2506 = vadd.f32 0.0, %v2505
        %v2507 = vpop.f32.mrb[0].mxu0
        %v2508 = vpop.f32.mrb[0].mxu0
        %2509 = vdwg.mxu0
        %v2510 = vlaneseq
        %v2511 = vshrl.u32 %v2510, 7
        %v2512 = vsub.s32 0, %v2511
        %v2513 = vrot.slane %v1525, %v2512
        %v2514 = vlaneseq
        %v2515 = vshrl.u32 %v2514, 7
        %v2516 = vsub.s32 0, %v2515
        %v2517 = vrot.slane %v1526, %v2516
        %v2518 = vlaneseq
        %v2519 = vshrl.u32 %v2518, 7
        %v2520 = vsub.s32 0, %v2519
        %v2521 = vrot.slane %v1527, %v2520
        %v2522 = vlaneseq
        %v2523 = vshrl.u32 %v2522, 7
        %v2524 = vsub.s32 0, %v2523
        %v2525 = vrot.slane %v1528, %v2524
        %v2526 = vlaneseq
        %v2527 = vshrl.u32 %v2526, 7
        %v2528 = vsub.s32 0, %v2527
        %v2529 = vrot.slane %v1529, %v2528
        %v2530 = vlaneseq
        %v2531 = vshrl.u32 %v2530, 7
        %v2532 = vsub.s32 0, %v2531
        %v2533 = vrot.slane %v1530, %v2532
        %v2534 = vlaneseq
        %v2535 = vshrl.u32 %v2534, 7
        %v2536 = vsub.s32 0, %v2535
        %v2537 = vrot.slane %v1531, %v2536
        %v2538 = vlaneseq
        %v2539 = vshrl.u32 %v2538, 7
        %v2540 = vsub.s32 0, %v2539
        %v2541 = vrot.slane %v1532, %v2540
        %v2542 = vlaneseq
        %v2543 = vshrl.u32 %v2542, 7
        %v2544 = vsub.s32 0, %v2543
        %v2545 = vrot.slane %v1533, %v2544
        %v2546 = vlaneseq
        %v2547 = vshrl.u32 %v2546, 7
        %v2548 = vsub.s32 0, %v2547
        %v2549 = vrot.slane %v1534, %v2548
        %v2550 = vlaneseq
        %v2551 = vshrl.u32 %v2550, 7
        %v2552 = vsub.s32 0, %v2551
        %v2553 = vrot.slane %v1535, %v2552
        %v2554 = vlaneseq
        %v2555 = vshrl.u32 %v2554, 7
        %v2556 = vsub.s32 0, %v2555
        %v2557 = vrot.slane %v1536, %v2556
        %v2558 = vlaneseq
        %v2559 = vshrl.u32 %v2558, 7
        %v2560 = vsub.s32 0, %v2559
        %v2561 = vrot.slane %v1537, %v2560
        %v2562 = vlaneseq
        %v2563 = vshrl.u32 %v2562, 7
        %v2564 = vsub.s32 0, %v2563
        %v2565 = vrot.slane %v1538, %v2564
        %v2566 = vlaneseq
        %v2567 = vshrl.u32 %v2566, 7
        %v2568 = vsub.s32 0, %v2567
        %v2569 = vrot.slane %v1539, %v2568
        %v2570 = vlaneseq
        %v2571 = vshrl.u32 %v2570, 7
        %v2572 = vsub.s32 0, %v2571
        %v2573 = vrot.slane %v1540, %v2572
        %v2574 = vmul.f32 %v2217, %v2513
        %v2575 = vmul.f32 %v2219, %v2517
        %v2576 = vmul.f32 %v2258, %v2521
        %v2577 = vmul.f32 %v2260, %v2525
        %v2578 = vmul.f32 %v2299, %v2529
        %v2579 = vmul.f32 %v2301, %v2533
        %v2580 = vmul.f32 %v2340, %v2537
        %v2581 = vmul.f32 %v2342, %v2541
        %v2582 = vmul.f32 %v2381, %v2545
        %v2583 = vmul.f32 %v2383, %v2549
        %v2584 = vmul.f32 %v2422, %v2553
        %v2585 = vmul.f32 %v2424, %v2557
        %v2586 = vmul.f32 %v2463, %v2561
        %v2587 = vmul.f32 %v2465, %v2565
        %v2588 = vmul.f32 %v2504, %v2569
        %v2589 = vmul.f32 %v2506, %v2573
        %v2590 = vmax.f32 %v2574, -63.936
        %v2591 = vmax.f32 %v2575, -63.936
        %v2592 = vmax.f32 %v2576, -63.936
        %v2593 = vmax.f32 %v2577, -63.936
        %v2594 = vmax.f32 %v2578, -63.936
        %v2595 = vmax.f32 %v2579, -63.936
        %v2596 = vmax.f32 %v2580, -63.936
        %v2597 = vmax.f32 %v2581, -63.936
        %v2598 = vmax.f32 %v2582, -63.936
        %v2599 = vmax.f32 %v2583, -63.936
        %v2600 = vmax.f32 %v2584, -63.936
        %v2601 = vmax.f32 %v2585, -63.936
        %v2602 = vmax.f32 %v2586, -63.936
        %v2603 = vmax.f32 %v2587, -63.936
        %v2604 = vmax.f32 %v2588, -63.936
        %v2605 = vmax.f32 %v2589, -63.936
        %v2606 = vmin.f32 %v2590, 63.936
        %v2607 = vmin.f32 %v2591, 63.936
        %v2608 = vmin.f32 %v2592, 63.936
        %v2609 = vmin.f32 %v2593, 63.936
        %v2610 = vmin.f32 %v2594, 63.936
        %v2611 = vmin.f32 %v2595, 63.936
        %v2612 = vmin.f32 %v2596, 63.936
        %v2613 = vmin.f32 %v2597, 63.936
        %v2614 = vmin.f32 %v2598, 63.936
        %v2615 = vmin.f32 %v2599, 63.936
        %v2616 = vmin.f32 %v2600, 63.936
        %v2617 = vmin.f32 %v2601, 63.936
        %v2618 = vmin.f32 %v2602, 63.936
        %v2619 = vmin.f32 %v2603, 63.936
        %v2620 = vmin.f32 %v2604, 63.936
        %v2621 = vmin.f32 %v2605, 63.936
        %v2622 = vlaneseq
        %v2623 = vand.u32 %v2622, 127
        %v2624 = vadd.s32 %v2623, 128
        %v2625 = vadd.s32 %v2623, 256
        %v2626 = vadd.s32 %v2623, 384
        %v2627 = vadd.s32 %v2623, 512
        %v2628 = vadd.s32 %v2623, 640
        %v2629 = vadd.s32 %v2623, 768
        %v2630 = vadd.s32 %v2623, 896
        %v2631 = vadd.s32 %v2623, 1024
        %v2632 = vadd.s32 %v2623, 1152
        %v2633 = vadd.s32 %v2623, 1280
        %v2634 = vadd.s32 %v2623, 1408
        %v2635 = vadd.s32 %v2623, 1536
        %v2636 = vadd.s32 %v2623, 1664
        %v2637 = vadd.s32 %v2623, 1792
        %v2638 = vadd.s32 %v2623, 1920
        %v2639 = vld [vmem:[%s272] sm:$0xff]
        %s2640 = smul.u32 %s26, 2048
        %v2641 = vstv %s2640
        %v2642 = vsub.s32 %v2639, %v2641
        %2643 = vset.pattern.permute.xlu0 0
        %2644 = vperm.xlu0 %2643, %v2642
        %v2645 = vpop.permute.xlu0 %2644
        %vm2646 = vcmp.eq.s32.totalorder %v2623, %v2645
        %vm2647 = vcmp.eq.s32.totalorder %v2624, %v2645
        %vm2648 = vcmp.eq.s32.totalorder %v2625, %v2645
        %vm2649 = vcmp.eq.s32.totalorder %v2626, %v2645
        %vm2650 = vcmp.eq.s32.totalorder %v2627, %v2645
        %vm2651 = vcmp.eq.s32.totalorder %v2628, %v2645
        %vm2652 = vcmp.eq.s32.totalorder %v2629, %v2645
        %vm2653 = vcmp.eq.s32.totalorder %v2630, %v2645
        %vm2654 = vcmp.eq.s32.totalorder %v2631, %v2645
        %vm2655 = vcmp.eq.s32.totalorder %v2632, %v2645
        %vm2656 = vcmp.eq.s32.totalorder %v2633, %v2645
        %vm2657 = vcmp.eq.s32.totalorder %v2634, %v2645
        %vm2658 = vcmp.eq.s32.totalorder %v2635, %v2645
        %vm2659 = vcmp.eq.s32.totalorder %v2636, %v2645
        %vm2660 = vcmp.eq.s32.totalorder %v2637, %v2645
        %vm2661 = vcmp.eq.s32.totalorder %v2638, %v2645
        %v2662 = vld [vmem:[%s276] sm:$0xff]
        %2664 = vset.pattern.permute.xlu0 0
        %2665 = vperm.xlu0 %2664, %v2662
        %v2666 = vpop.permute.xlu0 %2665
        %v2668 = vsel %vm2646, %v2666, %v2606
        %v2669 = vsel %vm2647, %v2666, %v2607
        %v2670 = vsel %vm2648, %v2666, %v2608
        %v2671 = vsel %vm2649, %v2666, %v2609
        %v2672 = vsel %vm2650, %v2666, %v2610
        %v2673 = vsel %vm2651, %v2666, %v2611
        %v2674 = vsel %vm2652, %v2666, %v2612
        %v2675 = vsel %vm2653, %v2666, %v2613
        %v2676 = vsel %vm2654, %v2666, %v2614
        %v2677 = vsel %vm2655, %v2666, %v2615
        %v2678 = vsel %vm2656, %v2666, %v2616
        %v2679 = vsel %vm2657, %v2666, %v2617
        %v2680 = vsel %vm2658, %v2666, %v2618
        %v2681 = vsel %vm2659, %v2666, %v2619
        %v2682 = vsel %vm2660, %v2666, %v2620
        %v2683 = vsel %vm2661, %v2666, %v2621
        %2684 = vst [vmem:[%s268] sm:$0xff] %v2668
        %2685 = vst [vmem:[%s268 + $0x8] sm:$0xff] %v2669
        %2686 = vst [vmem:[%s268 + $0x10] sm:$0xff] %v2670
        %2687 = vst [vmem:[%s268 + $0x18] sm:$0xff] %v2671
        %2688 = vst [vmem:[%s268 + $0x20] sm:$0xff] %v2672
        %2689 = vst [vmem:[%s268 + $0x28] sm:$0xff] %v2673
        %2690 = vst [vmem:[%s268 + $0x30] sm:$0xff] %v2674
        %2691 = vst [vmem:[%s268 + $0x38] sm:$0xff] %v2675
        %2692 = vst [vmem:[%s268 + $0x40] sm:$0xff] %v2676
        %2693 = vst [vmem:[%s268 + $0x48] sm:$0xff] %v2677
        %2694 = vst [vmem:[%s268 + $0x50] sm:$0xff] %v2678
        %2695 = vst [vmem:[%s268 + $0x58] sm:$0xff] %v2679
        %2696 = vst [vmem:[%s268 + $0x60] sm:$0xff] %v2680
        %2697 = vst [vmem:[%s268 + $0x68] sm:$0xff] %v2681
        %2698 = vst [vmem:[%s268 + $0x70] sm:$0xff] %v2682
        %2699 = vst [vmem:[%s268 + $0x78] sm:$0xff] %v2683
        %s2700 = sand.u32 %s147, 1
        %s2701 = scalar_lea.sflag [#allocation4], %s2700
        %s2702 = sand.u32 %s147, 1
        %s2703 = smul.addr %s2702, 128
        %s2704 = scalar_lea.vmem [#allocation5], %s2703
        // Predicated region
        $region41: #{tpu_custom_call.1} parent=35 // pred_check
          %p2705 = pneg %p157
        $region42: #{tpu_custom_call.1} parent=35 // pred_check_branch
          %2707 = sbr.rel (%p2705) target = $region44
        $region43: #{tpu_custom_call.1} parent=35 // pred_region
          %s2708 = smul.u32 16, %s26
          %s2710 = ssub.s32 2048, 2048
          %2711 = vsyncadd %s2701, %s2710
          %s2712 = smul.addr %s25, 32
          %s2713 = sadd.s32 %s2708, %s2712
          %s2714 = smul.addr %s2713, 128
          %s2715 = scalar_lea.hbm %s4, %s2714
          %s2717 = sshll.u32 %s2704, 4
          %s2718 = int_to_ptr.vmem [resolvable:$true] %s2717
          %2720 = dma.vmem_to_hbm [thread:$0]  %s2718, 2048, %s2715, %s2701
        $region44: #{tpu_custom_call.1} parent=35 // pred_fallthru
          _
      $region36: #{tpu_custom_call.1} parent=5 // pred_fallthru
        _
      %p2721 = scmp.le.s32.totalorder 2, %s16
      // Predicated region
      $region45: #{tpu_custom_call.1} parent=5 // pred_check
        %p2722 = pneg %p2721
      $region46: #{tpu_custom_call.1} parent=5 // pred_check_branch
        %2724 = sbr.rel (%p2722) target = $region48
      $region47: #{tpu_custom_call.1} parent=5 // pred_region
        %s2725 = ssub.s32 %s16, 2
        // Predicated region
        $region49: #{tpu_custom_call.1} parent=47 // pred_check
          %p2726 = pneg %p163
        $region50: #{tpu_custom_call.1} parent=47 // pred_check_branch
          %2728 = sbr.rel (%p2726) target = $region52
        $region51: #{tpu_custom_call.1} parent=47 // pred_region
          %s2729 = sand.u32 %s148, 1
          %s2730 = scalar_lea.sflag [#allocation4], %s2729
          %s2731 = sand.u32 %s148, 1
          %s2732 = smul.addr %s2731, 128
          %s2733 = scalar_lea.vmem [#allocation5], %s2732
          %2734 = dma.done %s2730, 2048
        $region52: #{tpu_custom_call.1} parent=47 // pred_fallthru
          _
      $region48: #{tpu_custom_call.1} parent=5 // pred_fallthru
        _
    $region6: #{tpu_custom_call.1} parent=1 // loop_footer
      %s20 = sadd.s32 1, %s16
    $region7: #{tpu_custom_call.1} parent=1 // loop_footer_branch
      %15 = sbr.rel target = $region3
    $region8: #{tpu_custom_call.1} parent=1 // loop_exit
      _
    %2735 = vsyncpa [#allocation3], 1
    %s2736 = scalar_lea.sflag [#allocation3], 1
    %2737 = vsyncpa %s2736, 1
    %2738 = vsyncpa [#allocation4], 1
    %s2739 = scalar_lea.sflag [#allocation4], 1
    %2740 = vsyncpa %s2739, 1

</llo_original>
